<compile_context>
chip_gen: v6e
topology: v6e:2x2x1
jax: 0.10.0
libtpu: 0.0.40
codegen_flags: <defaults>
</compile_context>

<pallas_src>
import math
import functools

import jax
import jax.numpy as jnp
from jax.experimental import pallas as pl
from jax.experimental.pallas import tpu as pltpu


def _lstm_kernel(x_ref, wx_ref, wh_ref, b_ref, h0_ref, c0_ref,
                 hseq_ref, h_out_ref, c_out_ref, *, hidden, t_block):
    tb = pl.program_id(0)

    # Initialize the resident recurrent state on the first time block.
    @pl.when(tb == 0)
    def _():
        h_out_ref[...] = h0_ref[...]
        c_out_ref[...] = c0_ref[...]

    wh = wh_ref[...]                                   # (hidden, 4H) bf16

    # Non-recurrent input projection for the whole time block in ONE wide
    # matmul, with the bias folded in once (not once per step):
    # (t_block, bs, input) @ (input, 4H) -> (t_block, bs, 4H), f32 acc.
    gx = jax.lax.dot_general(
        x_ref[...], wx_ref[...],
        dimension_numbers=(((2,), (0,)), ((), ())),
        preferred_element_type=jnp.float32)
    gx = gx + b_ref[...]                               # broadcast (1, 4H)

    h = h_out_ref[...]                                 # (bs, hidden) f32
    c = c_out_ref[...]                                 # (bs, hidden) f32

    def cell(g, h, c):
        # One wide sigmoid over the i/f/o slab, one tanh over the c~ slab.
        ifo = jax.nn.sigmoid(g[:, :3 * hidden])
        i_gate = ifo[:, :hidden]
        f_gate = ifo[:, hidden:2 * hidden]
        o_gate = ifo[:, 2 * hidden:]
        c_tilda = jnp.tanh(g[:, 3 * hidden:])
        c_new = f_gate * c + i_gate * c_tilda
        h_new = o_gate * jnp.tanh(c_new)
        return h_new, c_new

    if t_block <= 32:
        # Static trip count -> straight-line code; gx[i] / hseq_ref[i] are
        # leading-axis slab accesses (lane-dense, no masked stores).
        for i in range(t_block):
            g = gx[i] + jnp.dot(h.astype(jnp.bfloat16), wh,
                                preferred_element_type=jnp.float32)
            h, c = cell(g, h, c)
            hseq_ref[i] = h.astype(hseq_ref.dtype)
    else:
        # Larger blocks: bounded live ranges via fori_loop with modest unroll.
        def step(i, carry):
            h, c = carry
            g = (jax.lax.dynamic_index_in_dim(gx, i, axis=0, keepdims=False)
                 + jnp.dot(h.astype(jnp.bfloat16), wh,
                           preferred_element_type=jnp.float32))
            h, c = cell(g, h, c)
            hseq_ref[i] = h.astype(hseq_ref.dtype)
            return h, c

        h, c = jax.lax.fori_loop(0, t_block, step, (h, c), unroll=8)

    h_out_ref[...] = h
    c_out_ref[...] = c


def _pick_t_block(seq_sz, max_block=64):
    """Largest divisor of seq_sz that is <= max_block and tile-friendly."""
    if seq_sz <= max_block:
        return seq_sz
    for cand in range(max_block, 7, -1):
        if seq_sz % cand == 0 and cand % 8 == 0:
            return cand
    return seq_sz  # fall back: whole sequence in one block


def naive_custom_lstm(x, params, init_states=None, t_block=None):
    """x: (batch, seq, input_size) float32.  Returns (hidden_seq, (h_t, c_t))."""
    bs, seq_sz, input_size = x.shape
    hidden = params["W_hi"].shape[0]
    h4 = 4 * hidden

    if t_block is None:
        t_block = _pick_t_block(seq_sz)
    assert seq_sz % t_block == 0
    n_blocks = seq_sz // t_block

    # Fused gate weights (gate order: i, f, o, c).  bf16 operands for the MXU;
    # accumulation and element-wise math remain f32 inside the kernel.
    wx = jnp.concatenate(
        [params["W_xi"], params["W_xf"], params["W_xo"], params["W_xc"]],
        axis=1).astype(jnp.bfloat16)                       # (input, 4H)
    wh = jnp.concatenate(
        [params["W_hi"], params["W_hf"], params["W_ho"], params["W_hc"]],
        axis=1).astype(jnp.bfloat16)                       # (hidden, 4H)
    b = jnp.concatenate(
        [params["b_i"], params["b_f"], params["b_o"], params["b_c"]]
    ).reshape(1, h4).astype(jnp.float32)                   # (1, 4H)

    # Time-major so per-step kernel accesses are leading-axis slabs.
    x_tm = jnp.transpose(x, (1, 0, 2)).astype(jnp.bfloat16)  # (seq, bs, input)

    if init_states is None:
        h0 = jnp.zeros((bs, hidden), jnp.float32)
        c0 = jnp.zeros((bs, hidden), jnp.float32)
    else:
        h0, c0 = init_states
        h0 = h0.astype(jnp.float32)
        c0 = c0.astype(jnp.float32)

    kernel = functools.partial(_lstm_kernel, hidden=hidden, t_block=t_block)

    in_specs = [
        pl.BlockSpec((t_block, bs, input_size), lambda tb: (tb, 0, 0)),  # x
        pl.BlockSpec((input_size, h4), lambda tb: (0, 0)),               # Wx
        pl.BlockSpec((hidden, h4), lambda tb: (0, 0)),                   # Wh
        pl.BlockSpec((1, h4), lambda tb: (0, 0)),                        # b
        pl.BlockSpec((bs, hidden), lambda tb: (0, 0)),                   # h0
        pl.BlockSpec((bs, hidden), lambda tb: (0, 0)),                   # c0
    ]
    out_specs = [
        pl.BlockSpec((t_block, bs, hidden), lambda tb: (tb, 0, 0)),      # hseq
        pl.BlockSpec((bs, hidden), lambda tb: (0, 0)),                   # h_t
        pl.BlockSpec((bs, hidden), lambda tb: (0, 0)),                   # c_t
    ]
    out_shapes = (
        jax.ShapeDtypeStruct((seq_sz, bs, hidden), jnp.bfloat16),  # time-major
        jax.ShapeDtypeStruct((bs, hidden), jnp.float32),
        jax.ShapeDtypeStruct((bs, hidden), jnp.float32),
    )

    # Explicit VMEM limit from the block footprint (double-buffered in/out
    # blocks + the f32 gx intermediate), capped at v7x's 64 MiB physical.
    est = (2 * (t_block * bs * input_size * 2)       # x block
           + 2 * (input_size * h4 * 2)               # Wx
           + 2 * (hidden * h4 * 2)                   # Wh
           + 2 * (h4 * 4)                            # bias
           + 4 * (bs * hidden * 4)                   # h0, c0
           + 2 * (t_block * bs * hidden * 2)         # hseq block
           + 4 * (bs * hidden * 4)                   # h_t, c_t
           + t_block * bs * h4 * 4)                  # gx (f32)
    vmem_limit = int(min(64 * 2**20, max(2 * est, 32 * 2**20)))

    hidden_seq_tm, h_t, c_t = pl.pallas_call(
        kernel,
        out_shape=out_shapes,
        grid_spec=pltpu.PrefetchScalarGridSpec(
            num_scalar_prefetch=0,
            grid=(n_blocks,),
            in_specs=in_specs,
            out_specs=out_specs,
        ),
        # h0 -> h_t, c0 -> c_t: no separate output HBM buffers.
        input_output_aliases={4: 1, 5: 2},
        compiler_params=pltpu.CompilerParams(
            # Time recurrence is strictly sequential.
            dimension_semantics=("arbitrary",),
            vmem_limit_bytes=vmem_limit),
    )(x_tm, wx, wh, b, h0, c0)

    # Back to (batch, seq, hidden) f32 to match the module interface.
    hidden_seq = jnp.transpose(hidden_seq_tm, (1, 0, 2)).astype(jnp.float32)
    return hidden_seq, (h_t, c_t)


def init_params(key, input_size, hidden_size):
    stdv = 1.0 / math.sqrt(hidden_size)
    names_shapes = [
        ("W_xi", (input_size, hidden_size)), ("W_hi", (hidden_size, hidden_size)),
        ("b_i", (hidden_size,)),
        ("W_xf", (input_size, hidden_size)), ("W_hf", (hidden_size, hidden_size)),
        ("b_f", (hidden_size,)),
        ("W_xc", (input_size, hidden_size)), ("W_hc", (hidden_size, hidden_size)),
        ("b_c", (hidden_size,)),
        ("W_xo", (input_size, hidden_size)), ("W_ho", (hidden_size, hidden_size)),
        ("b_o", (hidden_size,)),
        ("W_hq", (hidden_size, hidden_size)), ("b_q", (hidden_size,)),  # unused in forward
    ]
    keys = jax.random.split(key, len(names_shapes))
    params = {}
    for (name, shape), k in zip(names_shapes, keys):
        params[name] = jax.random.uniform(
            k, shape, dtype=jnp.float32, minval=-stdv, maxval=stdv)
    return params


def reference_lstm(x, params):
    """Pure-JAX float32 reference mirroring the PyTorch forward."""
    bs, seq_sz, _ = x.shape
    hidden = params["W_hi"].shape[0]
    h_t = jnp.zeros((bs, hidden), jnp.float32)
    c_t = jnp.zeros((bs, hidden), jnp.float32)
    outs = []
    for t in range(seq_sz):
        x_t = x[:, t, :]
        i = jax.nn.sigmoid(x_t @ params["W_xi"] + h_t @ params["W_hi"] + params["b_i"])
        f = jax.nn.sigmoid(x_t @ params["W_xf"] + h_t @ params["W_hf"] + params["b_f"])
        o = jax.nn.sigmoid(x_t @ params["W_xo"] + h_t @ params["W_ho"] + params["b_o"])
        ct = jnp.tanh(x_t @ params["W_xc"] + h_t @ params["W_hc"] + params["b_c"])
        c_t = f * c_t + i * ct
        h_t = o * jnp.tanh(c_t)
        outs.append(h_t)
    return jnp.stack(outs, axis=1), (h_t, c_t)


if __name__ == "__main__":
    batch, seq, input_size, hidden_size = 2, 8, 16, 32

    key = jax.random.PRNGKey(0)
    pkey, xkey = jax.random.split(key)
    params = init_params(pkey, input_size, hidden_size)
    x = jax.random.normal(xkey, (batch, seq, input_size), dtype=jnp.float32)

    hidden_seq, (h_t, c_t) = naive_custom_lstm(x, params)
    jax.block_until_ready((hidden_seq, h_t, c_t))

    ref_seq, (ref_h, ref_c) = reference_lstm(x, params)
    assert hidden_seq.shape == (batch, seq, hidden_size)
    assert h_t.shape == (batch, hidden_size) and c_t.shape == (batch, hidden_size)
    # Tolerance relaxed vs. pure-f32: matmul operands are bf16 and hidden_seq
    # is stored bf16 (accumulation and element-wise state math remain f32).
    assert jnp.allclose(hidden_seq, ref_seq, atol=2e-2, rtol=2e-2), (
        float(jnp.max(jnp.abs(hidden_seq - ref_seq))))
    assert jnp.allclose(h_t, ref_h, atol=2e-2, rtol=2e-2)
    assert jnp.allclose(c_t, ref_c, atol=2e-2, rtol=2e-2)

    print("KERNEL_OK")
</pallas_src>

<mosaic_0001>
module attributes {stable_mosaic.version = 11 : i64} {
  func.func @_lstm_kernel(%arg0: i32, %arg1: memref<8x2x16xbf16, #tpu.memory_space<vmem>>, %arg2: memref<16x128xbf16, #tpu.memory_space<vmem>>, %arg3: memref<32x128xbf16, #tpu.memory_space<vmem>>, %arg4: memref<1x128xf32, #tpu.memory_space<vmem>>, %arg5: memref<2x32xf32, #tpu.memory_space<vmem>>, %arg6: memref<2x32xf32, #tpu.memory_space<vmem>>, %arg7: memref<8x2x32xbf16, #tpu.memory_space<vmem>>, %arg8: memref<2x32xf32, #tpu.memory_space<vmem>>, %arg9: memref<2x32xf32, #tpu.memory_space<vmem>>) attributes {dimension_semantics = [#tpu.dimension_semantics<arbitrary>], iteration_bounds = array<i64: 1>, scalar_prefetch = 0 : i64, scratch_operands = 0 : i64, tpu.core_type = #tpu.core_type<tc>, window_params = [{transform_indices = @transform_0, window_bounds = array<i64: 8, 2, 16>}, {pipeline_mode = #tpu.pipeline_mode<synchronous>, transform_indices = @transform_1, window_bounds = array<i64: 16, 128>}, {pipeline_mode = #tpu.pipeline_mode<synchronous>, transform_indices = @transform_2, window_bounds = array<i64: 32, 128>}, {pipeline_mode = #tpu.pipeline_mode<synchronous>, transform_indices = @transform_3, window_bounds = array<i64: 1, 128>}, {pipeline_mode = #tpu.pipeline_mode<synchronous>, transform_indices = @transform_4, window_bounds = array<i64: 2, 32>}, {pipeline_mode = #tpu.pipeline_mode<synchronous>, transform_indices = @transform_5, window_bounds = array<i64: 2, 32>}, {transform_indices = @transform_6, window_bounds = array<i64: 8, 2, 32>}, {pipeline_mode = #tpu.pipeline_mode<synchronous>, transform_indices = @transform_7, window_bounds = array<i64: 2, 32>}, {pipeline_mode = #tpu.pipeline_mode<synchronous>, transform_indices = @transform_8, window_bounds = array<i64: 2, 32>}]} {
    %c0_i32 = arith.constant 0 : i32
    %0 = arith.cmpi eq, %arg0, %c0_i32 : i32
    %1 = arith.extui %0 : i1 to i32
    %c0_i32_0 = arith.constant 0 : i32
    %2 = arith.cmpi ne, %1, %c0_i32_0 : i32
    scf.if %2 {
      %c0_50 = arith.constant 0 : index
      %c0_51 = arith.constant 0 : index
      %215 = vector.load %arg5[%c0_50, %c0_51] : memref<2x32xf32, #tpu.memory_space<vmem>>, vector<2x32xf32>
      %c0_52 = arith.constant 0 : index
      %c0_53 = arith.constant 0 : index
      %216 = vector.load %arg8[%c0_52, %c0_53] : memref<2x32xf32, #tpu.memory_space<vmem>>, vector<2x32xf32>
      tpu.vector_store %arg8[%c0_52, %c0_53], %215 {strides = array<i32>} : memref<2x32xf32, #tpu.memory_space<vmem>>, vector<2x32xf32>,
      %c0_54 = arith.constant 0 : index
      %c0_55 = arith.constant 0 : index
      %217 = vector.load %arg6[%c0_54, %c0_55] : memref<2x32xf32, #tpu.memory_space<vmem>>, vector<2x32xf32>
      %c0_56 = arith.constant 0 : index
      %c0_57 = arith.constant 0 : index
      %218 = vector.load %arg9[%c0_56, %c0_57] : memref<2x32xf32, #tpu.memory_space<vmem>>, vector<2x32xf32>
      tpu.vector_store %arg9[%c0_56, %c0_57], %217 {strides = array<i32>} : memref<2x32xf32, #tpu.memory_space<vmem>>, vector<2x32xf32>,
    } else {
    }
    %c0 = arith.constant 0 : index
    %c0_1 = arith.constant 0 : index
    %3 = vector.load %arg3[%c0, %c0_1] : memref<32x128xbf16, #tpu.memory_space<vmem>>, vector<32x128xbf16>
    %c0_2 = arith.constant 0 : index
    %c0_3 = arith.constant 0 : index
    %c0_4 = arith.constant 0 : index
    %4 = vector.load %arg1[%c0_2, %c0_3, %c0_4] : memref<8x2x16xbf16, #tpu.memory_space<vmem>>, vector<8x2x16xbf16>
    %c0_5 = arith.constant 0 : index
    %c0_6 = arith.constant 0 : index
    %5 = vector.load %arg2[%c0_5, %c0_6] : memref<16x128xbf16, #tpu.memory_space<vmem>>, vector<16x128xbf16>
    %cst = arith.constant dense<0.000000e+00> : vector<8x2x128xf32>
    %6 = tpu.matmul %4, %5, %cst {dimension_numbers = #tpu.dot_dimension_numbers<[2], [0], [0, 1], [1], [0, 0, 0, 1, 1, 1], [], []>} : vector<8x2x16xbf16>, vector<16x128xbf16>, vector<8x2x128xf32> -> vector<8x2x128xf32>
    %c0_7 = arith.constant 0 : index
    %c0_8 = arith.constant 0 : index
    %7 = vector.load %arg4[%c0_7, %c0_8] : memref<1x128xf32, #tpu.memory_space<vmem>>, vector<1x128xf32>
    %8 = vector.shape_cast %7 : vector<1x128xf32> to vector<1x1x128xf32>
    %9 = vector.broadcast %8 : vector<1x1x128xf32> to vector<8x2x128xf32>
    %10 = arith.addf %6, %9 : vector<8x2x128xf32>
    %c0_9 = arith.constant 0 : index
    %c0_10 = arith.constant 0 : index
    %11 = vector.load %arg8[%c0_9, %c0_10] : memref<2x32xf32, #tpu.memory_space<vmem>>, vector<2x32xf32>
    %c0_11 = arith.constant 0 : index
    %c0_12 = arith.constant 0 : index
    %12 = vector.load %arg9[%c0_11, %c0_12] : memref<2x32xf32, #tpu.memory_space<vmem>>, vector<2x32xf32>
    %13 = vector.extract_strided_slice %10 {offsets = [0, 0, 0], sizes = [1, 2, 128], strides = [1, 1, 1]} : vector<8x2x128xf32> to vector<1x2x128xf32>
    %14 = vector.shape_cast %13 : vector<1x2x128xf32> to vector<2x128xf32>
    %15 = arith.truncf %11 : vector<2x32xf32> to vector<2x32xbf16>
    %cst_13 = arith.constant dense<0.000000e+00> : vector<2x128xf32>
    %16 = tpu.matmul %15, %3, %cst_13 {dimension_numbers = #tpu.dot_dimension_numbers<[1], [0], [0], [1], [0, 0, 1, 1], [], []>} : vector<2x32xbf16>, vector<32x128xbf16>, vector<2x128xf32> -> vector<2x128xf32>
    %17 = arith.addf %14, %16 : vector<2x128xf32>
    %18 = vector.extract_strided_slice %17 {offsets = [0, 0], sizes = [2, 96], strides = [1, 1]} : vector<2x128xf32> to vector<2x96xf32>
    %19 = arith.negf %18 : vector<2x96xf32>
    %20 = math.exp %19 : vector<2x96xf32>
    %cst_14 = arith.constant 1.000000e+00 : f32
    %21 = vector.broadcast %cst_14 : f32 to vector<2x96xf32>
    %22 = arith.addf %21, %20 : vector<2x96xf32>
    %23 = arith.divf %21, %22 : vector<2x96xf32>
    %24 = vector.extract_strided_slice %23 {offsets = [0, 0], sizes = [2, 32], strides = [1, 1]} : vector<2x96xf32> to vector<2x32xf32>
    %25 = vector.extract_strided_slice %23 {offsets = [0, 32], sizes = [2, 32], strides = [1, 1]} : vector<2x96xf32> to vector<2x32xf32>
    %26 = vector.extract_strided_slice %23 {offsets = [0, 64], sizes = [2, 32], strides = [1, 1]} : vector<2x96xf32> to vector<2x32xf32>
    %27 = vector.extract_strided_slice %17 {offsets = [0, 96], sizes = [2, 32], strides = [1, 1]} : vector<2x128xf32> to vector<2x32xf32>
    %28 = math.tanh %27 : vector<2x32xf32>
    %29 = arith.mulf %25, %12 : vector<2x32xf32>
    %30 = arith.mulf %24, %28 : vector<2x32xf32>
    %31 = arith.addf %29, %30 : vector<2x32xf32>
    %32 = math.tanh %31 : vector<2x32xf32>
    %33 = arith.mulf %26, %32 : vector<2x32xf32>
    %34 = arith.truncf %33 : vector<2x32xf32> to vector<2x32xbf16>
    %c0_15 = arith.constant 0 : index
    %c0_16 = arith.constant 0 : index
    %c0_17 = arith.constant 0 : index
    %35 = vector.load %arg7[%c0_15, %c0_16, %c0_17] : memref<8x2x32xbf16, #tpu.memory_space<vmem>>, vector<1x2x32xbf16>
    %36 = vector.shape_cast %35 : vector<1x2x32xbf16> to vector<2x32xbf16>
    %37 = vector.shape_cast %34 : vector<2x32xbf16> to vector<1x2x32xbf16>
    tpu.vector_store %arg7[%c0_15, %c0_16, %c0_17], %37 {strides = array<i32>} : memref<8x2x32xbf16, #tpu.memory_space<vmem>>, vector<1x2x32xbf16>,
    %38 = vector.extract_strided_slice %10 {offsets = [1, 0, 0], sizes = [1, 2, 128], strides = [1, 1, 1]} : vector<8x2x128xf32> to vector<1x2x128xf32>
    %39 = vector.shape_cast %38 : vector<1x2x128xf32> to vector<2x128xf32>
    %40 = arith.truncf %33 : vector<2x32xf32> to vector<2x32xbf16>
    %cst_18 = arith.constant dense<0.000000e+00> : vector<2x128xf32>
    %41 = tpu.matmul %40, %3, %cst_18 {dimension_numbers = #tpu.dot_dimension_numbers<[1], [0], [0], [1], [0, 0, 1, 1], [], []>} : vector<2x32xbf16>, vector<32x128xbf16>, vector<2x128xf32> -> vector<2x128xf32>
    %42 = arith.addf %39, %41 : vector<2x128xf32>
    %43 = vector.extract_strided_slice %42 {offsets = [0, 0], sizes = [2, 96], strides = [1, 1]} : vector<2x128xf32> to vector<2x96xf32>
    %44 = arith.negf %43 : vector<2x96xf32>
    %45 = math.exp %44 : vector<2x96xf32>
    %cst_19 = arith.constant 1.000000e+00 : f32
    %46 = vector.broadcast %cst_19 : f32 to vector<2x96xf32>
    %47 = arith.addf %46, %45 : vector<2x96xf32>
    %48 = arith.divf %46, %47 : vector<2x96xf32>
    %49 = vector.extract_strided_slice %48 {offsets = [0, 0], sizes = [2, 32], strides = [1, 1]} : vector<2x96xf32> to vector<2x32xf32>
    %50 = vector.extract_strided_slice %48 {offsets = [0, 32], sizes = [2, 32], strides = [1, 1]} : vector<2x96xf32> to vector<2x32xf32>
    %51 = vector.extract_strided_slice %48 {offsets = [0, 64], sizes = [2, 32], strides = [1, 1]} : vector<2x96xf32> to vector<2x32xf32>
    %52 = vector.extract_strided_slice %42 {offsets = [0, 96], sizes = [2, 32], strides = [1, 1]} : vector<2x128xf32> to vector<2x32xf32>
    %53 = math.tanh %52 : vector<2x32xf32>
    %54 = arith.mulf %50, %31 : vector<2x32xf32>
    %55 = arith.mulf %49, %53 : vector<2x32xf32>
    %56 = arith.addf %54, %55 : vector<2x32xf32>
    %57 = math.tanh %56 : vector<2x32xf32>
    %58 = arith.mulf %51, %57 : vector<2x32xf32>
    %59 = arith.truncf %58 : vector<2x32xf32> to vector<2x32xbf16>
    %c1 = arith.constant 1 : index
    %c0_20 = arith.constant 0 : index
    %c0_21 = arith.constant 0 : index
    %60 = vector.load %arg7[%c1, %c0_20, %c0_21] : memref<8x2x32xbf16, #tpu.memory_space<vmem>>, vector<1x2x32xbf16>
    %61 = vector.shape_cast %60 : vector<1x2x32xbf16> to vector<2x32xbf16>
    %62 = vector.shape_cast %59 : vector<2x32xbf16> to vector<1x2x32xbf16>
    tpu.vector_store %arg7[%c1, %c0_20, %c0_21], %62 {strides = array<i32>} : memref<8x2x32xbf16, #tpu.memory_space<vmem>>, vector<1x2x32xbf16>,
    %63 = vector.extract_strided_slice %10 {offsets = [2, 0, 0], sizes = [1, 2, 128], strides = [1, 1, 1]} : vector<8x2x128xf32> to vector<1x2x128xf32>
    %64 = vector.shape_cast %63 : vector<1x2x128xf32> to vector<2x128xf32>
    %65 = arith.truncf %58 : vector<2x32xf32> to vector<2x32xbf16>
    %cst_22 = arith.constant dense<0.000000e+00> : vector<2x128xf32>
    %66 = tpu.matmul %65, %3, %cst_22 {dimension_numbers = #tpu.dot_dimension_numbers<[1], [0], [0], [1], [0, 0, 1, 1], [], []>} : vector<2x32xbf16>, vector<32x128xbf16>, vector<2x128xf32> -> vector<2x128xf32>
    %67 = arith.addf %64, %66 : vector<2x128xf32>
    %68 = vector.extract_strided_slice %67 {offsets = [0, 0], sizes = [2, 96], strides = [1, 1]} : vector<2x128xf32> to vector<2x96xf32>
    %69 = arith.negf %68 : vector<2x96xf32>
    %70 = math.exp %69 : vector<2x96xf32>
    %cst_23 = arith.constant 1.000000e+00 : f32
    %71 = vector.broadcast %cst_23 : f32 to vector<2x96xf32>
    %72 = arith.addf %71, %70 : vector<2x96xf32>
    %73 = arith.divf %71, %72 : vector<2x96xf32>
    %74 = vector.extract_strided_slice %73 {offsets = [0, 0], sizes = [2, 32], strides = [1, 1]} : vector<2x96xf32> to vector<2x32xf32>
    %75 = vector.extract_strided_slice %73 {offsets = [0, 32], sizes = [2, 32], strides = [1, 1]} : vector<2x96xf32> to vector<2x32xf32>
    %76 = vector.extract_strided_slice %73 {offsets = [0, 64], sizes = [2, 32], strides = [1, 1]} : vector<2x96xf32> to vector<2x32xf32>
    %77 = vector.extract_strided_slice %67 {offsets = [0, 96], sizes = [2, 32], strides = [1, 1]} : vector<2x128xf32> to vector<2x32xf32>
    %78 = math.tanh %77 : vector<2x32xf32>
    %79 = arith.mulf %75, %56 : vector<2x32xf32>
    %80 = arith.mulf %74, %78 : vector<2x32xf32>
    %81 = arith.addf %79, %80 : vector<2x32xf32>
    %82 = math.tanh %81 : vector<2x32xf32>
    %83 = arith.mulf %76, %82 : vector<2x32xf32>
    %84 = arith.truncf %83 : vector<2x32xf32> to vector<2x32xbf16>
    %c2 = arith.constant 2 : index
    %c0_24 = arith.constant 0 : index
    %c0_25 = arith.constant 0 : index
    %85 = vector.load %arg7[%c2, %c0_24, %c0_25] : memref<8x2x32xbf16, #tpu.memory_space<vmem>>, vector<1x2x32xbf16>
    %86 = vector.shape_cast %85 : vector<1x2x32xbf16> to vector<2x32xbf16>
    %87 = vector.shape_cast %84 : vector<2x32xbf16> to vector<1x2x32xbf16>
    tpu.vector_store %arg7[%c2, %c0_24, %c0_25], %87 {strides = array<i32>} : memref<8x2x32xbf16, #tpu.memory_space<vmem>>, vector<1x2x32xbf16>,
    %88 = vector.extract_strided_slice %10 {offsets = [3, 0, 0], sizes = [1, 2, 128], strides = [1, 1, 1]} : vector<8x2x128xf32> to vector<1x2x128xf32>
    %89 = vector.shape_cast %88 : vector<1x2x128xf32> to vector<2x128xf32>
    %90 = arith.truncf %83 : vector<2x32xf32> to vector<2x32xbf16>
    %cst_26 = arith.constant dense<0.000000e+00> : vector<2x128xf32>
    %91 = tpu.matmul %90, %3, %cst_26 {dimension_numbers = #tpu.dot_dimension_numbers<[1], [0], [0], [1], [0, 0, 1, 1], [], []>} : vector<2x32xbf16>, vector<32x128xbf16>, vector<2x128xf32> -> vector<2x128xf32>
    %92 = arith.addf %89, %91 : vector<2x128xf32>
    %93 = vector.extract_strided_slice %92 {offsets = [0, 0], sizes = [2, 96], strides = [1, 1]} : vector<2x128xf32> to vector<2x96xf32>
    %94 = arith.negf %93 : vector<2x96xf32>
    %95 = math.exp %94 : vector<2x96xf32>
    %cst_27 = arith.constant 1.000000e+00 : f32
    %96 = vector.broadcast %cst_27 : f32 to vector<2x96xf32>
    %97 = arith.addf %96, %95 : vector<2x96xf32>
    %98 = arith.divf %96, %97 : vector<2x96xf32>
    %99 = vector.extract_strided_slice %98 {offsets = [0, 0], sizes = [2, 32], strides = [1, 1]} : vector<2x96xf32> to vector<2x32xf32>
    %100 = vector.extract_strided_slice %98 {offsets = [0, 32], sizes = [2, 32], strides = [1, 1]} : vector<2x96xf32> to vector<2x32xf32>
    %101 = vector.extract_strided_slice %98 {offsets = [0, 64], sizes = [2, 32], strides = [1, 1]} : vector<2x96xf32> to vector<2x32xf32>
    %102 = vector.extract_strided_slice %92 {offsets = [0, 96], sizes = [2, 32], strides = [1, 1]} : vector<2x128xf32> to vector<2x32xf32>
    %103 = math.tanh %102 : vector<2x32xf32>
    %104 = arith.mulf %100, %81 : vector<2x32xf32>
    %105 = arith.mulf %99, %103 : vector<2x32xf32>
    %106 = arith.addf %104, %105 : vector<2x32xf32>
    %107 = math.tanh %106 : vector<2x32xf32>
    %108 = arith.mulf %101, %107 : vector<2x32xf32>
    %109 = arith.truncf %108 : vector<2x32xf32> to vector<2x32xbf16>
    %c3 = arith.constant 3 : index
    %c0_28 = arith.constant 0 : index
    %c0_29 = arith.constant 0 : index
    %110 = vector.load %arg7[%c3, %c0_28, %c0_29] : memref<8x2x32xbf16, #tpu.memory_space<vmem>>, vector<1x2x32xbf16>
    %111 = vector.shape_cast %110 : vector<1x2x32xbf16> to vector<2x32xbf16>
    %112 = vector.shape_cast %109 : vector<2x32xbf16> to vector<1x2x32xbf16>
    tpu.vector_store %arg7[%c3, %c0_28, %c0_29], %112 {strides = array<i32>} : memref<8x2x32xbf16, #tpu.memory_space<vmem>>, vector<1x2x32xbf16>,
    %113 = vector.extract_strided_slice %10 {offsets = [4, 0, 0], sizes = [1, 2, 128], strides = [1, 1, 1]} : vector<8x2x128xf32> to vector<1x2x128xf32>
    %114 = vector.shape_cast %113 : vector<1x2x128xf32> to vector<2x128xf32>
    %115 = arith.truncf %108 : vector<2x32xf32> to vector<2x32xbf16>
    %cst_30 = arith.constant dense<0.000000e+00> : vector<2x128xf32>
    %116 = tpu.matmul %115, %3, %cst_30 {dimension_numbers = #tpu.dot_dimension_numbers<[1], [0], [0], [1], [0, 0, 1, 1], [], []>} : vector<2x32xbf16>, vector<32x128xbf16>, vector<2x128xf32> -> vector<2x128xf32>
    %117 = arith.addf %114, %116 : vector<2x128xf32>
    %118 = vector.extract_strided_slice %117 {offsets = [0, 0], sizes = [2, 96], strides = [1, 1]} : vector<2x128xf32> to vector<2x96xf32>
    %119 = arith.negf %118 : vector<2x96xf32>
    %120 = math.exp %119 : vector<2x96xf32>
    %cst_31 = arith.constant 1.000000e+00 : f32
    %121 = vector.broadcast %cst_31 : f32 to vector<2x96xf32>
    %122 = arith.addf %121, %120 : vector<2x96xf32>
    %123 = arith.divf %121, %122 : vector<2x96xf32>
    %124 = vector.extract_strided_slice %123 {offsets = [0, 0], sizes = [2, 32], strides = [1, 1]} : vector<2x96xf32> to vector<2x32xf32>
    %125 = vector.extract_strided_slice %123 {offsets = [0, 32], sizes = [2, 32], strides = [1, 1]} : vector<2x96xf32> to vector<2x32xf32>
    %126 = vector.extract_strided_slice %123 {offsets = [0, 64], sizes = [2, 32], strides = [1, 1]} : vector<2x96xf32> to vector<2x32xf32>
    %127 = vector.extract_strided_slice %117 {offsets = [0, 96], sizes = [2, 32], strides = [1, 1]} : vector<2x128xf32> to vector<2x32xf32>
    %128 = math.tanh %127 : vector<2x32xf32>
    %129 = arith.mulf %125, %106 : vector<2x32xf32>
    %130 = arith.mulf %124, %128 : vector<2x32xf32>
    %131 = arith.addf %129, %130 : vector<2x32xf32>
    %132 = math.tanh %131 : vector<2x32xf32>
    %133 = arith.mulf %126, %132 : vector<2x32xf32>
    %134 = arith.truncf %133 : vector<2x32xf32> to vector<2x32xbf16>
    %c4 = arith.constant 4 : index
    %c0_32 = arith.constant 0 : index
    %c0_33 = arith.constant 0 : index
    %135 = vector.load %arg7[%c4, %c0_32, %c0_33] : memref<8x2x32xbf16, #tpu.memory_space<vmem>>, vector<1x2x32xbf16>
    %136 = vector.shape_cast %135 : vector<1x2x32xbf16> to vector<2x32xbf16>
    %137 = vector.shape_cast %134 : vector<2x32xbf16> to vector<1x2x32xbf16>
    tpu.vector_store %arg7[%c4, %c0_32, %c0_33], %137 {strides = array<i32>} : memref<8x2x32xbf16, #tpu.memory_space<vmem>>, vector<1x2x32xbf16>,
    %138 = vector.extract_strided_slice %10 {offsets = [5, 0, 0], sizes = [1, 2, 128], strides = [1, 1, 1]} : vector<8x2x128xf32> to vector<1x2x128xf32>
    %139 = vector.shape_cast %138 : vector<1x2x128xf32> to vector<2x128xf32>
    %140 = arith.truncf %133 : vector<2x32xf32> to vector<2x32xbf16>
    %cst_34 = arith.constant dense<0.000000e+00> : vector<2x128xf32>
    %141 = tpu.matmul %140, %3, %cst_34 {dimension_numbers = #tpu.dot_dimension_numbers<[1], [0], [0], [1], [0, 0, 1, 1], [], []>} : vector<2x32xbf16>, vector<32x128xbf16>, vector<2x128xf32> -> vector<2x128xf32>
    %142 = arith.addf %139, %141 : vector<2x128xf32>
    %143 = vector.extract_strided_slice %142 {offsets = [0, 0], sizes = [2, 96], strides = [1, 1]} : vector<2x128xf32> to vector<2x96xf32>
    %144 = arith.negf %143 : vector<2x96xf32>
    %145 = math.exp %144 : vector<2x96xf32>
    %cst_35 = arith.constant 1.000000e+00 : f32
    %146 = vector.broadcast %cst_35 : f32 to vector<2x96xf32>
    %147 = arith.addf %146, %145 : vector<2x96xf32>
    %148 = arith.divf %146, %147 : vector<2x96xf32>
    %149 = vector.extract_strided_slice %148 {offsets = [0, 0], sizes = [2, 32], strides = [1, 1]} : vector<2x96xf32> to vector<2x32xf32>
    %150 = vector.extract_strided_slice %148 {offsets = [0, 32], sizes = [2, 32], strides = [1, 1]} : vector<2x96xf32> to vector<2x32xf32>
    %151 = vector.extract_strided_slice %148 {offsets = [0, 64], sizes = [2, 32], strides = [1, 1]} : vector<2x96xf32> to vector<2x32xf32>
    %152 = vector.extract_strided_slice %142 {offsets = [0, 96], sizes = [2, 32], strides = [1, 1]} : vector<2x128xf32> to vector<2x32xf32>
    %153 = math.tanh %152 : vector<2x32xf32>
    %154 = arith.mulf %150, %131 : vector<2x32xf32>
    %155 = arith.mulf %149, %153 : vector<2x32xf32>
    %156 = arith.addf %154, %155 : vector<2x32xf32>
    %157 = math.tanh %156 : vector<2x32xf32>
    %158 = arith.mulf %151, %157 : vector<2x32xf32>
    %159 = arith.truncf %158 : vector<2x32xf32> to vector<2x32xbf16>
    %c5 = arith.constant 5 : index
    %c0_36 = arith.constant 0 : index
    %c0_37 = arith.constant 0 : index
    %160 = vector.load %arg7[%c5, %c0_36, %c0_37] : memref<8x2x32xbf16, #tpu.memory_space<vmem>>, vector<1x2x32xbf16>
    %161 = vector.shape_cast %160 : vector<1x2x32xbf16> to vector<2x32xbf16>
    %162 = vector.shape_cast %159 : vector<2x32xbf16> to vector<1x2x32xbf16>
    tpu.vector_store %arg7[%c5, %c0_36, %c0_37], %162 {strides = array<i32>} : memref<8x2x32xbf16, #tpu.memory_space<vmem>>, vector<1x2x32xbf16>,
    %163 = vector.extract_strided_slice %10 {offsets = [6, 0, 0], sizes = [1, 2, 128], strides = [1, 1, 1]} : vector<8x2x128xf32> to vector<1x2x128xf32>
    %164 = vector.shape_cast %163 : vector<1x2x128xf32> to vector<2x128xf32>
    %165 = arith.truncf %158 : vector<2x32xf32> to vector<2x32xbf16>
    %cst_38 = arith.constant dense<0.000000e+00> : vector<2x128xf32>
    %166 = tpu.matmul %165, %3, %cst_38 {dimension_numbers = #tpu.dot_dimension_numbers<[1], [0], [0], [1], [0, 0, 1, 1], [], []>} : vector<2x32xbf16>, vector<32x128xbf16>, vector<2x128xf32> -> vector<2x128xf32>
    %167 = arith.addf %164, %166 : vector<2x128xf32>
    %168 = vector.extract_strided_slice %167 {offsets = [0, 0], sizes = [2, 96], strides = [1, 1]} : vector<2x128xf32> to vector<2x96xf32>
    %169 = arith.negf %168 : vector<2x96xf32>
    %170 = math.exp %169 : vector<2x96xf32>
    %cst_39 = arith.constant 1.000000e+00 : f32
    %171 = vector.broadcast %cst_39 : f32 to vector<2x96xf32>
    %172 = arith.addf %171, %170 : vector<2x96xf32>
    %173 = arith.divf %171, %172 : vector<2x96xf32>
    %174 = vector.extract_strided_slice %173 {offsets = [0, 0], sizes = [2, 32], strides = [1, 1]} : vector<2x96xf32> to vector<2x32xf32>
    %175 = vector.extract_strided_slice %173 {offsets = [0, 32], sizes = [2, 32], strides = [1, 1]} : vector<2x96xf32> to vector<2x32xf32>
    %176 = vector.extract_strided_slice %173 {offsets = [0, 64], sizes = [2, 32], strides = [1, 1]} : vector<2x96xf32> to vector<2x32xf32>
    %177 = vector.extract_strided_slice %167 {offsets = [0, 96], sizes = [2, 32], strides = [1, 1]} : vector<2x128xf32> to vector<2x32xf32>
    %178 = math.tanh %177 : vector<2x32xf32>
    %179 = arith.mulf %175, %156 : vector<2x32xf32>
    %180 = arith.mulf %174, %178 : vector<2x32xf32>
    %181 = arith.addf %179, %180 : vector<2x32xf32>
    %182 = math.tanh %181 : vector<2x32xf32>
    %183 = arith.mulf %176, %182 : vector<2x32xf32>
    %184 = arith.truncf %183 : vector<2x32xf32> to vector<2x32xbf16>
    %c6 = arith.constant 6 : index
    %c0_40 = arith.constant 0 : index
    %c0_41 = arith.constant 0 : index
    %185 = vector.load %arg7[%c6, %c0_40, %c0_41] : memref<8x2x32xbf16, #tpu.memory_space<vmem>>, vector<1x2x32xbf16>
    %186 = vector.shape_cast %185 : vector<1x2x32xbf16> to vector<2x32xbf16>
    %187 = vector.shape_cast %184 : vector<2x32xbf16> to vector<1x2x32xbf16>
    tpu.vector_store %arg7[%c6, %c0_40, %c0_41], %187 {strides = array<i32>} : memref<8x2x32xbf16, #tpu.memory_space<vmem>>, vector<1x2x32xbf16>,
    %188 = vector.extract_strided_slice %10 {offsets = [7, 0, 0], sizes = [1, 2, 128], strides = [1, 1, 1]} : vector<8x2x128xf32> to vector<1x2x128xf32>
    %189 = vector.shape_cast %188 : vector<1x2x128xf32> to vector<2x128xf32>
    %190 = arith.truncf %183 : vector<2x32xf32> to vector<2x32xbf16>
    %cst_42 = arith.constant dense<0.000000e+00> : vector<2x128xf32>
    %191 = tpu.matmul %190, %3, %cst_42 {dimension_numbers = #tpu.dot_dimension_numbers<[1], [0], [0], [1], [0, 0, 1, 1], [], []>} : vector<2x32xbf16>, vector<32x128xbf16>, vector<2x128xf32> -> vector<2x128xf32>
    %192 = arith.addf %189, %191 : vector<2x128xf32>
    %193 = vector.extract_strided_slice %192 {offsets = [0, 0], sizes = [2, 96], strides = [1, 1]} : vector<2x128xf32> to vector<2x96xf32>
    %194 = arith.negf %193 : vector<2x96xf32>
    %195 = math.exp %194 : vector<2x96xf32>
    %cst_43 = arith.constant 1.000000e+00 : f32
    %196 = vector.broadcast %cst_43 : f32 to vector<2x96xf32>
    %197 = arith.addf %196, %195 : vector<2x96xf32>
    %198 = arith.divf %196, %197 : vector<2x96xf32>
    %199 = vector.extract_strided_slice %198 {offsets = [0, 0], sizes = [2, 32], strides = [1, 1]} : vector<2x96xf32> to vector<2x32xf32>
    %200 = vector.extract_strided_slice %198 {offsets = [0, 32], sizes = [2, 32], strides = [1, 1]} : vector<2x96xf32> to vector<2x32xf32>
    %201 = vector.extract_strided_slice %198 {offsets = [0, 64], sizes = [2, 32], strides = [1, 1]} : vector<2x96xf32> to vector<2x32xf32>
    %202 = vector.extract_strided_slice %192 {offsets = [0, 96], sizes = [2, 32], strides = [1, 1]} : vector<2x128xf32> to vector<2x32xf32>
    %203 = math.tanh %202 : vector<2x32xf32>
    %204 = arith.mulf %200, %181 : vector<2x32xf32>
    %205 = arith.mulf %199, %203 : vector<2x32xf32>
    %206 = arith.addf %204, %205 : vector<2x32xf32>
    %207 = math.tanh %206 : vector<2x32xf32>
    %208 = arith.mulf %201, %207 : vector<2x32xf32>
    %209 = arith.truncf %208 : vector<2x32xf32> to vector<2x32xbf16>
    %c7 = arith.constant 7 : index
    %c0_44 = arith.constant 0 : index
    %c0_45 = arith.constant 0 : index
    %210 = vector.load %arg7[%c7, %c0_44, %c0_45] : memref<8x2x32xbf16, #tpu.memory_space<vmem>>, vector<1x2x32xbf16>
    %211 = vector.shape_cast %210 : vector<1x2x32xbf16> to vector<2x32xbf16>
    %212 = vector.shape_cast %209 : vector<2x32xbf16> to vector<1x2x32xbf16>
    tpu.vector_store %arg7[%c7, %c0_44, %c0_45], %212 {strides = array<i32>} : memref<8x2x32xbf16, #tpu.memory_space<vmem>>, vector<1x2x32xbf16>,
    %c0_46 = arith.constant 0 : index
    %c0_47 = arith.constant 0 : index
    %213 = vector.load %arg8[%c0_46, %c0_47] : memref<2x32xf32, #tpu.memory_space<vmem>>, vector<2x32xf32>
    tpu.vector_store %arg8[%c0_46, %c0_47], %208 {strides = array<i32>} : memref<2x32xf32, #tpu.memory_space<vmem>>, vector<2x32xf32>,
    %c0_48 = arith.constant 0 : index
    %c0_49 = arith.constant 0 : index
    %214 = vector.load %arg9[%c0_48, %c0_49] : memref<2x32xf32, #tpu.memory_space<vmem>>, vector<2x32xf32>
    tpu.vector_store %arg9[%c0_48, %c0_49], %206 {strides = array<i32>} : memref<2x32xf32, #tpu.memory_space<vmem>>, vector<2x32xf32>,
    return
  }
  func.func @transform_0(%arg0: i32) -> (i32, i32, i32) {
    %c0_i32 = arith.constant 0 : i32
    %c0_i32_0 = arith.constant 0 : i32
    %c0_i32_1 = arith.constant 0 : i32
    return %arg0, %c0_i32, %c0_i32_0 : i32, i32, i32
  }
  func.func @transform_1(%arg0: i32) -> (i32, i32) {
    %c0_i32 = arith.constant 0 : i32
    %c0_i32_0 = arith.constant 0 : i32
    %c0_i32_1 = arith.constant 0 : i32
    return %c0_i32, %c0_i32_0 : i32, i32
  }
  func.func @transform_2(%arg0: i32) -> (i32, i32) {
    %c0_i32 = arith.constant 0 : i32
    %c0_i32_0 = arith.constant 0 : i32
    %c0_i32_1 = arith.constant 0 : i32
    return %c0_i32, %c0_i32_0 : i32, i32
  }
  func.func @transform_3(%arg0: i32) -> (i32, i32) {
    %c0_i32 = arith.constant 0 : i32
    %c0_i32_0 = arith.constant 0 : i32
    %c0_i32_1 = arith.constant 0 : i32
    return %c0_i32, %c0_i32_0 : i32, i32
  }
  func.func @transform_4(%arg0: i32) -> (i32, i32) {
    %c0_i32 = arith.constant 0 : i32
    %c0_i32_0 = arith.constant 0 : i32
    %c0_i32_1 = arith.constant 0 : i32
    return %c0_i32, %c0_i32_0 : i32, i32
  }
  func.func @transform_5(%arg0: i32) -> (i32, i32) {
    %c0_i32 = arith.constant 0 : i32
    %c0_i32_0 = arith.constant 0 : i32
    %c0_i32_1 = arith.constant 0 : i32
    return %c0_i32, %c0_i32_0 : i32, i32
  }
  func.func @transform_6(%arg0: i32) -> (i32, i32, i32) {
    %c0_i32 = arith.constant 0 : i32
    %c0_i32_0 = arith.constant 0 : i32
    %c0_i32_1 = arith.constant 0 : i32
    return %arg0, %c0_i32, %c0_i32_0 : i32, i32, i32
  }
  func.func @transform_7(%arg0: i32) -> (i32, i32) {
    %c0_i32 = arith.constant 0 : i32
    %c0_i32_0 = arith.constant 0 : i32
    %c0_i32_1 = arith.constant 0 : i32
    return %c0_i32, %c0_i32_0 : i32, i32
  }
  func.func @transform_8(%arg0: i32) -> (i32, i32) {
    %c0_i32 = arith.constant 0 : i32
    %c0_i32_0 = arith.constant 0 : i32
    %c0_i32_1 = arith.constant 0 : i32
    return %c0_i32, %c0_i32_0 : i32, i32
  }
}

</mosaic_0001>

<llo_original>
// kernel: tpu_custom_call.1
$region0: #{tpu_custom_call.1}
  #allocation0 [shape = 'u32[]', space=smem, size = 0x4, offset = 0x4, fixed_abs, tag = 'smem constant byte address 0x4 - core index']
  #allocation1 [shape = 'u32[144,128]{1,0:T(1,128)}', space=vmem, size = 0x12000, scoped, tag = 'internal scratch']
  %s0 = inlined_call_operand.vmem [shape: bf16[8,2,16], index: 0, kind: input, shape index: {}]
  %s1 = inlined_call_operand.hbm [shape: bf16[16,128], index: 1, kind: input, shape index: {}]
  %s2 = inlined_call_operand.hbm [shape: bf16[32,128], index: 2, kind: input, shape index: {}]
  %s3 = inlined_call_operand.vmem [shape: f32[1,128], index: 3, kind: input, shape index: {}]
  %s4 = inlined_call_operand.hbm [shape: f32[2,32], index: 4, kind: input, shape index: {}, may-alias: {4,7}]
  %s5 = inlined_call_operand.hbm [shape: f32[2,32], index: 5, kind: input, shape index: {}, may-alias: {5,8}]
  %s6 = inlined_call_operand.hbm [shape: bf16[8,2,32], index: 6, kind: output, shape index: {0}]
  %s7 = inlined_call_operand.hbm [shape: f32[2,32], index: 7, kind: output, shape index: {1}, may-alias: {4,7}]
  %s8 = inlined_call_operand.hbm [shape: f32[2,32], index: 8, kind: output, shape index: {2}, may-alias: {5,8}]
  %9 = xla_tuple %s6, %s7, %s8
  %s10 = sld [smem:[#allocation0]]
  $region70: #{tpu_custom_call.1} parent=0
    _
  %s12 = ssub.s32 1, %s10
  %s13 = scalar_select 0, %s12, %s10
  $region1: #{tpu_custom_call.1} parent=0
    #allocation2 [shape = 'u8[4096]{0}', space=vmem, size = 0x1000, scoped, tag = 'input window, operand 1, single buffered']
    #allocation3 [shape = 's32[1]{0}', space=sflag, size = 0x4, scoped, tag = 'scoped memory for tpu_custom_call.1']
    #allocation4 [shape = 's32[1]{0}', space=sflag, size = 0x4, scoped, tag = 'scoped memory for tpu_custom_call.1']
    #allocation5 [shape = 'u8[8192]{0}', space=vmem, size = 0x2000, scoped, tag = 'input window, operand 2, single buffered']
    #allocation6 [shape = 's32[1]{0}', space=sflag, size = 0x4, scoped, tag = 'scoped memory for tpu_custom_call.1']
    #allocation7 [shape = 'u8[1024]{0}', space=vmem, size = 0x400, scoped, tag = 'input window, operand 4, single buffered']
    #allocation8 [shape = 'u8[1024]{0}', space=vmem, size = 0x400, scoped, tag = 'input window, operand 5, single buffered']
    #allocation9 [shape = 's32[1]{0}', space=sflag, size = 0x4, scoped, tag = 'scoped memory for tpu_custom_call.1']
    #allocation10 [shape = 'u8[4096]{0}', space=vmem, size = 0x1000, scoped, tag = 'output window, operand 0, single buffered']
    #allocation11 [shape = 'u8[1024]{0}', space=vmem, size = 0x400, scoped, tag = 'output window, operand 1, single buffered']
    #allocation12 [shape = 's32[1]{0}', space=sflag, size = 0x4, scoped, tag = 'scoped memory for tpu_custom_call.1']
    #allocation13 [shape = 'u8[1024]{0}', space=vmem, size = 0x400, scoped, tag = 'output window, operand 2, single buffered']
    %14 = vsyncpa [#allocation3], 0
    %15 = vsyncpa [#allocation6], 0
    %16 = vsyncpa [#allocation9], 0
    %17 = vsyncpa [#allocation4], 0
    %18 = vsyncpa [#allocation12], 0
    // Predicated region
    $region2: #{tpu_custom_call.1} parent=1 // pred_check
      _
    $region3: #{tpu_custom_call.1} parent=1 // pred_check_branch
      %20 = sbr.rel (0) target = $region5
    $region4: #{tpu_custom_call.1} parent=1 // pred_region
      _
    $region5: #{tpu_custom_call.1} parent=1 // pred_fallthru
      _
    // Predicated region
    $region6: #{tpu_custom_call.1} parent=1 // pred_check
      _
    $region7: #{tpu_custom_call.1} parent=1 // pred_check_branch
      %22 = sbr.rel (0) target = $region9
    $region8: #{tpu_custom_call.1} parent=1 // pred_region
      %s24 = ssub.s32 128, 128
      %25 = vsyncadd [#allocation3], %s24
      %s26 = sshll.u32 [#allocation2], 4
      %s27 = int_to_ptr.vmem [resolvable:$true] %s26
      %32 = dma.hbm_to_vmem [thread:$0]  %s1, 128, %s27, [#allocation3], 64, 64, 4
    $region9: #{tpu_custom_call.1} parent=1 // pred_fallthru
      _
    // Predicated region
    $region10: #{tpu_custom_call.1} parent=1 // pred_check
      _
    $region11: #{tpu_custom_call.1} parent=1 // pred_check_branch
      %34 = sbr.rel (0) target = $region13
    $region12: #{tpu_custom_call.1} parent=1 // pred_region
      %s36 = ssub.s32 256, 256
      %37 = vsyncadd [#allocation6], %s36
      %s38 = sshll.u32 [#allocation5], 4
      %s39 = int_to_ptr.vmem [resolvable:$true] %s38
      %44 = dma.hbm_to_vmem [thread:$0]  %s2, 256, %s39, [#allocation6], 64, 64, 4
    $region13: #{tpu_custom_call.1} parent=1 // pred_fallthru
      _
    // Predicated region
    $region14: #{tpu_custom_call.1} parent=1 // pred_check
      _
    $region15: #{tpu_custom_call.1} parent=1 // pred_check_branch
      %46 = sbr.rel (0) target = $region17
    $region16: #{tpu_custom_call.1} parent=1 // pred_region
      _
    $region17: #{tpu_custom_call.1} parent=1 // pred_fallthru
      _
    // Predicated region
    $region18: #{tpu_custom_call.1} parent=1 // pred_check
      _
    $region19: #{tpu_custom_call.1} parent=1 // pred_check_branch
      %48 = sbr.rel (0) target = $region21
    $region20: #{tpu_custom_call.1} parent=1 // pred_region
      %s50 = ssub.s32 32, 32
      %51 = vsyncadd [#allocation6], %s50
      %s53 = sshll.u32 [#allocation7], 4
      %s54 = int_to_ptr.vmem [resolvable:$true] %s53
      %56 = dma.hbm_to_vmem [thread:$0]  %s4, 32, %s54, [#allocation6]
    $region21: #{tpu_custom_call.1} parent=1 // pred_fallthru
      _
    // Predicated region
    $region22: #{tpu_custom_call.1} parent=1 // pred_check
      _
    $region23: #{tpu_custom_call.1} parent=1 // pred_check_branch
      %58 = sbr.rel (0) target = $region25
    $region24: #{tpu_custom_call.1} parent=1 // pred_region
      %s60 = ssub.s32 32, 32
      %61 = vsyncadd [#allocation9], %s60
      %s63 = sshll.u32 [#allocation8], 4
      %s64 = int_to_ptr.vmem [resolvable:$true] %s63
      %66 = dma.hbm_to_vmem [thread:$0]  %s5, 32, %s64, [#allocation9]
    $region25: #{tpu_custom_call.1} parent=1 // pred_fallthru
      _
    // Predicated region
    $region26: #{tpu_custom_call.1} parent=1 // pred_check
      _
    $region27: #{tpu_custom_call.1} parent=1 // pred_check_branch
      %68 = sbr.rel (0) target = $region29
    $region28: #{tpu_custom_call.1} parent=1 // pred_region
      %69 = dma.done [#allocation3], 128
    $region29: #{tpu_custom_call.1} parent=1 // pred_fallthru
      _
    // Predicated region
    $region30: #{tpu_custom_call.1} parent=1 // pred_check
      _
    $region31: #{tpu_custom_call.1} parent=1 // pred_check_branch
      %71 = sbr.rel (0) target = $region33
    $region32: #{tpu_custom_call.1} parent=1 // pred_region
      %72 = dma.done [#allocation6], 256
    $region33: #{tpu_custom_call.1} parent=1 // pred_fallthru
      _
    // Predicated region
    $region34: #{tpu_custom_call.1} parent=1 // pred_check
      _
    $region35: #{tpu_custom_call.1} parent=1 // pred_check_branch
      %74 = sbr.rel (0) target = $region37
    $region36: #{tpu_custom_call.1} parent=1 // pred_region
      %75 = dma.done [#allocation6], 32
    $region37: #{tpu_custom_call.1} parent=1 // pred_fallthru
      _
    // Predicated region
    $region38: #{tpu_custom_call.1} parent=1 // pred_check
      _
    $region39: #{tpu_custom_call.1} parent=1 // pred_check_branch
      %77 = sbr.rel (0) target = $region41
    $region40: #{tpu_custom_call.1} parent=1 // pred_region
      %78 = dma.done [#allocation9], 32
    $region41: #{tpu_custom_call.1} parent=1 // pred_fallthru
      _
    %p80 = scmp.eq.s32.totalorder 0, 0
    // Predicated region
    $region42: #{tpu_custom_call.1} parent=1 // pred_check
      %p81 = pneg %p80
    $region43: #{tpu_custom_call.1} parent=1 // pred_check_branch
      %83 = sbr.rel (%p81) target = $region45
    $region44: #{tpu_custom_call.1} parent=1 // pred_region
      %v84 = vld [vmem:[#allocation7] sm:$0x3]
      %vm85 = vcmask 254976
      %86 = vst.msk [vmem:[#allocation11] sm:$0x3] %vm85, %v84
      %v87 = vld [vmem:[#allocation8] sm:$0x3]
      %88 = vst.msk [vmem:[#allocation13] sm:$0x3] %vm85, %v87
    $region45: #{tpu_custom_call.1} parent=1 // pred_fallthru
      _
    %v89 = vld [vmem:[#allocation5] sm:$0xf]
    %v90 = vld [vmem:[#allocation5 + $0x4] sm:$0xf]
    %v91 = vld [vmem:[#allocation5 + $0x8] sm:$0xf]
    %v92 = vld [vmem:[#allocation5 + $0xc] sm:$0xf]
    %v93 = vld [vmem:[%s0] sm:$0x1]
    %v94 = vld [vmem:[%s0 + $0x1] sm:$0x1]
    %v95 = vld [vmem:[%s0 + $0x2] sm:$0x1]
    %v96 = vld [vmem:[%s0 + $0x3] sm:$0x1]
    %v97 = vld [vmem:[%s0 + $0x4] sm:$0x1]
    %v98 = vld [vmem:[%s0 + $0x5] sm:$0x1]
    %v99 = vld [vmem:[%s0 + $0x6] sm:$0x1]
    %v100 = vld [vmem:[%s0 + $0x7] sm:$0x1]
    %v101 = vld [vmem:[#allocation2] sm:$0xf]
    %v102 = vld [vmem:[#allocation2 + $0x4] sm:$0xf]
    %v103 = vld [vmem:[%s3] sm:$0x1]
    %v105 = vlaneseq
    %v106 = vshrl.u32 %v105, 7
    %v107 = vsub.s32 0, %v106
    %v108 = vrot.slane %v103, %v107
    %v117 = vcombine.low %v93, %v94
    %v118 = vcombine.low %v95, %v96
    %v119 = vcombine.low %v97, %v98
    %v120 = vcombine.low %v99, %v100
    %v122 = vunpack.c.l.s4 1966171168
    %v123 = vunpack.c.0.s8 %v122
    %v124 = vlaneseq
    %v125 = vshrl.u32 %v124, 7
    %v126 = vsub.s32 %v123, %v125
    %v127 = vrot.slane %v117, %v126
    %v129 = vunpack.c.l.s4 1966171168
    %v130 = vunpack.c.0.s8 %v129
    %v131 = vlaneseq
    %v132 = vshrl.u32 %v131, 7
    %v133 = vsub.s32 %v130, %v132
    %v134 = vrot.slane %v118, %v133
    %v136 = vunpack.c.l.s4 1966171168
    %v137 = vunpack.c.0.s8 %v136
    %v138 = vlaneseq
    %v139 = vshrl.u32 %v138, 7
    %v140 = vsub.s32 %v137, %v139
    %v141 = vrot.slane %v119, %v140
    %v143 = vunpack.c.l.s4 1966171168
    %v144 = vunpack.c.0.s8 %v143
    %v145 = vlaneseq
    %v146 = vshrl.u32 %v145, 7
    %v147 = vsub.s32 %v144, %v146
    %v148 = vrot.slane %v120, %v147
    %v149 = vcombine.low %v127, %v134
    %v150 = vcombine.low %v141, %v148
    %v152 = vunpack.c.l.s4 1966171168
    %v153 = vunpack.c.0.s8 %v152
    %v154 = vlaneseq
    %v155 = vshrl.u32 %v154, 7
    %v156 = vsub.s32 %v153, %v155
    %v157 = vrot.slane %v149, %v156
    %v159 = vunpack.c.l.s4 1966171168
    %v160 = vunpack.c.0.s8 %v159
    %v161 = vlaneseq
    %v162 = vshrl.u32 %v161, 7
    %v163 = vsub.s32 %v160, %v162
    %v164 = vrot.slane %v150, %v163
    %v165 = vcombine.low %v157, %v164
    %v168 = vunpack.c.l.b16 %v101
    %v169 = vunpack.c.l.b16 %v102
    %v170 = vpack.c.b16 %v169, %v168
    %v172 = vcombine.low %v108, %v108
    %v174 = vunpack.c.l.s4 1983009808
    %v175 = vunpack.c.0.s8 %v174
    %v176 = vlaneseq
    %v177 = vshrl.u32 %v176, 7
    %v178 = vsub.s32 %v175, %v177
    %v179 = vrot.slane %v172, %v178
    %v180 = vcombine.low %v179, %v179
    %vm182 = vcmask 130048
    %v184 = vsel %vm182, %v165, 0
    %186 = vmatprep.subr.bf16.mxu0 0
    %187 = vmatpush1.bf16.msra.mxu0 0
    %188 = vmatprep.subr.bf16.mxu0 0
    %189 = vmatpush1.bf16.msra.mxu0 0
    %190 = vmatprep.subr.bf16.mxu0 0
    %191 = vmatpush1.bf16.msra.mxu0 0
    %192 = vmatprep.subr.bf16.mxu0 0
    %193 = vmatpush1.bf16.msra.mxu0 0
    %194 = vmatprep.subr.bf16.mxu0 0
    %195 = vmatpush1.bf16.msra.mxu0 0
    %196 = vmatprep.subr.bf16.mxu0 0
    %197 = vmatpush1.bf16.msra.mxu0 0
    %198 = vmatprep.subr.bf16.mxu0 0
    %199 = vmatpush1.bf16.msra.mxu0 0
    %200 = vmatprep.subr.bf16.mxu0 0
    %201 = vmatpush1.bf16.msra.mxu0 %v170
    %202 = vmatprep.subr.bf16.mxu0 0
    %203 = vmatpush2.bf16.msra.mxu0 0
    %204 = vmatprep.subr.bf16.mxu0 0
    %205 = vmatpush2.bf16.msra.mxu0 0
    %206 = vmatprep.subr.bf16.mxu0 0
    %207 = vmatpush2.bf16.msra.mxu0 0
    %208 = vmatprep.subr.bf16.mxu0 0
    %209 = vmatpush2.bf16.msra.mxu0 0
    %210 = vmatprep.subr.bf16.mxu0 0
    %211 = vmatpush2.bf16.msra.mxu0 0
    %212 = vmatprep.subr.bf16.mxu0 0
    %213 = vmatpush2.bf16.msra.mxu0 0
    %214 = vmatprep.subr.bf16.mxu0 0
    %215 = vmatpush2.bf16.msra.mxu0 0
    %216 = vmatprep.subr.bf16.mxu0 0
    %217 = vmatpush2.bf16.msra.mxu0 0
    %218 = vmatprep.mubr.bf16.mxu0 0
    %219 = vmatmul.mubr.bf16.gmra.mxu0 %v184
    %v220 = vpop.f32.mrf.mxu0
    %v221 = vadd.f32 %v180, %v220
    %v222 = vpop.f32.mrf.mxu0
    %v223 = vpop.f32.mrf.mxu0
    %v224 = vadd.f32 %v180, %v223
    %v225 = vpop.f32.mrf.mxu0
    %226 = vdwg.mxu0
    %v229 = vcombine.high %v221, %v221
    %v231 = vunpack.c.l.s4 1983009808
    %v232 = vunpack.c.0.s8 %v231
    %v233 = vlaneseq
    %v234 = vshrl.u32 %v233, 7
    %v235 = vsub.s32 %v232, %v234
    %v236 = vrot.slane %v221, %v235
    %v238 = vunpack.c.l.s4 1983009808
    %v239 = vunpack.c.0.s8 %v238
    %v240 = vlaneseq
    %v241 = vshrl.u32 %v240, 7
    %v242 = vsub.s32 %v239, %v241
    %v243 = vrot.slane %v229, %v242
    %v244 = vcombine.high %v236, %v236
    %v245 = vcombine.high %v243, %v243
    %v246 = vcombine.high %v224, %v224
    %v248 = vunpack.c.l.s4 1983009808
    %v249 = vunpack.c.0.s8 %v248
    %v250 = vlaneseq
    %v251 = vshrl.u32 %v250, 7
    %v252 = vsub.s32 %v249, %v251
    %v253 = vrot.slane %v224, %v252
    %v255 = vunpack.c.l.s4 1983009808
    %v256 = vunpack.c.0.s8 %v255
    %v257 = vlaneseq
    %v258 = vshrl.u32 %v257, 7
    %v259 = vsub.s32 %v256, %v258
    %v260 = vrot.slane %v246, %v259
    %v261 = vcombine.high %v253, %v253
    %v262 = vcombine.high %v260, %v260
    %v271 = vld [vmem:[#allocation11] sm:$0x3]
    %v272 = vld [vmem:[#allocation13] sm:$0x3]
    %v273 = vpack.c.bf16 %v271, %v271
    %v278 = vunpack.c.l.b16 %v89
    %v279 = vunpack.c.l.b16 %v90
    %v280 = vunpack.c.l.b16 %v91
    %v281 = vunpack.c.l.b16 %v92
    %v282 = vpack.c.b16 %v279, %v278
    %v283 = vpack.c.b16 %v281, %v280
    %vm286 = vcmask 261120
    %v288 = vsel %vm286, %v273, 0
    %290 = vmatprep.subr.bf16.mxu0 0
    %291 = vmatpush1.bf16.msra.mxu0 0
    %292 = vmatprep.subr.bf16.mxu0 0
    %293 = vmatpush1.bf16.msra.mxu0 0
    %294 = vmatprep.subr.bf16.mxu0 0
    %295 = vmatpush1.bf16.msra.mxu0 0
    %296 = vmatprep.subr.bf16.mxu0 0
    %297 = vmatpush1.bf16.msra.mxu0 0
    %298 = vmatprep.subr.bf16.mxu0 0
    %299 = vmatpush1.bf16.msra.mxu0 0
    %300 = vmatprep.subr.bf16.mxu0 0
    %301 = vmatpush1.bf16.msra.mxu0 0
    %302 = vmatprep.subr.bf16.mxu0 0
    %303 = vmatpush1.bf16.msra.mxu0 %v283
    %304 = vmatprep.subr.bf16.mxu0 0
    %305 = vmatpush1.bf16.msra.mxu0 %v282
    %306 = vmatprep.subr.bf16.mxu0 0
    %307 = vmatpush2.bf16.msra.mxu0 0
    %308 = vmatprep.subr.bf16.mxu0 0
    %309 = vmatpush2.bf16.msra.mxu0 0
    %310 = vmatprep.subr.bf16.mxu0 0
    %311 = vmatpush2.bf16.msra.mxu0 0
    %312 = vmatprep.subr.bf16.mxu0 0
    %313 = vmatpush2.bf16.msra.mxu0 0
    %314 = vmatprep.subr.bf16.mxu0 0
    %315 = vmatpush2.bf16.msra.mxu0 0
    %316 = vmatprep.subr.bf16.mxu0 0
    %317 = vmatpush2.bf16.msra.mxu0 0
    %318 = vmatprep.subr.bf16.mxu0 0
    %319 = vmatpush2.bf16.msra.mxu0 0
    %320 = vmatprep.subr.bf16.mxu0 0
    %321 = vmatpush2.bf16.msra.mxu0 0
    %322 = vmatprep.mubr.bf16.mxu0 0
    %323 = vmatmul.mubr.bf16.gmra.mxu0 %v288
    %v324 = vpop.f32.mrf.mxu0
    %v325 = vadd.f32 0.0, %v324
    %v326 = vpop.f32.mrf.mxu0
    %v327 = vpop.f32.mrf.mxu0
    %v328 = vpop.f32.mrf.mxu0
    %329 = vdwg.mxu0
    %v330 = vadd.f32 %v236, %v325
    %v331 = vxor.u32 %v330, 2147483648
    %v332 = vmul.f32 %v331, 1.442695
    %v333 = vpow.pop %v332
    %v334 = vadd.f32 %v333, 1.0
    %v335 = vrcp.pop %v334
    %v336 = vmul.f32 1.0, %v335
    %v337 = vtanh.pop %v330
    %v340 = vunpack.c.l.s4 1983009808
    %v341 = vunpack.c.0.s8 %v340
    %v342 = vlaneseq
    %v343 = vshrl.u32 %v342, 7
    %v344 = vsub.s32 %v341, %v343
    %v345 = vrot.slane %v272, %v344
    %346 = vrot.lane.b32.xlu0 %v345, 32
    %v347 = vpop.permute.xlu0 %346
    %v349 = vmul.f32 %v336, %v347
    %351 = vrot.lane.b32.xlu0 %v337, 32
    %v352 = vpop.permute.xlu0 %351
    %v354 = vmul.f32 %v336, %v352
    %356 = vrot.lane.b32.xlu0 %v354, 32
    %v357 = vpop.permute.xlu0 %356
    %v359 = vadd.f32 %v349, %v357
    %v360 = vtanh.pop %v359
    %362 = vrot.lane.b32.xlu0 %v360, 32
    %v363 = vpop.permute.xlu0 %362
    %v365 = vmul.f32 %v336, %v363
    %v366 = vpack.c.bf16 %v365, %v365
    %v369 = vunpack.c.l.s4 1966171168
    %v370 = vunpack.c.0.s8 %v369
    %v371 = vlaneseq
    %v372 = vshrl.u32 %v371, 7
    %v373 = vsub.s32 %v370, %v372
    %v374 = vrot.slane %v366, %v373
    %v376 = vunpack.c.l.s4 1966171168
    %v377 = vunpack.c.0.s8 %v376
    %v378 = vlaneseq
    %v379 = vshrl.u32 %v378, 7
    %v380 = vsub.s32 %v377, %v379
    %v381 = vrot.slane %v374, %v380
    %382 = vrot.lane.b32.xlu0 %v381, 64
    %v383 = vpop.permute.xlu0 %382
    %vm385 = vcmask 253952
    %386 = vst.msk [vmem:[#allocation10] sm:$0x1] %vm385, %v383
    %387 = vrot.lane.b32.xlu0 %v366, 64
    %v388 = vpop.permute.xlu0 %387
    %v390 = vsel %vm286, %v388, 0
    %392 = vmatprep.subr.bf16.mxu0 0
    %393 = vmatpush1.bf16.msra.mxu0 0
    %394 = vmatprep.subr.bf16.mxu0 0
    %395 = vmatpush1.bf16.msra.mxu0 0
    %396 = vmatprep.subr.bf16.mxu0 0
    %397 = vmatpush1.bf16.msra.mxu0 0
    %398 = vmatprep.subr.bf16.mxu0 0
    %399 = vmatpush1.bf16.msra.mxu0 0
    %400 = vmatprep.subr.bf16.mxu0 0
    %401 = vmatpush1.bf16.msra.mxu0 0
    %402 = vmatprep.subr.bf16.mxu0 0
    %403 = vmatpush1.bf16.msra.mxu0 0
    %404 = vmatprep.subr.bf16.mxu0 0
    %405 = vmatpush1.bf16.msra.mxu0 %v283
    %406 = vmatprep.subr.bf16.mxu0 0
    %407 = vmatpush1.bf16.msra.mxu0 %v282
    %408 = vmatprep.subr.bf16.mxu0 0
    %409 = vmatpush2.bf16.msra.mxu0 0
    %410 = vmatprep.subr.bf16.mxu0 0
    %411 = vmatpush2.bf16.msra.mxu0 0
    %412 = vmatprep.subr.bf16.mxu0 0
    %413 = vmatpush2.bf16.msra.mxu0 0
    %414 = vmatprep.subr.bf16.mxu0 0
    %415 = vmatpush2.bf16.msra.mxu0 0
    %416 = vmatprep.subr.bf16.mxu0 0
    %417 = vmatpush2.bf16.msra.mxu0 0
    %418 = vmatprep.subr.bf16.mxu0 0
    %419 = vmatpush2.bf16.msra.mxu0 0
    %420 = vmatprep.subr.bf16.mxu0 0
    %421 = vmatpush2.bf16.msra.mxu0 0
    %422 = vmatprep.subr.bf16.mxu0 0
    %423 = vmatpush2.bf16.msra.mxu0 0
    %424 = vmatprep.mubr.bf16.mxu0 0
    %425 = vmatmul.mubr.bf16.gmra.mxu0 %v390
    %v426 = vpop.f32.mrf.mxu0
    %v427 = vadd.f32 0.0, %v426
    %v428 = vpop.f32.mrf.mxu0
    %v429 = vpop.f32.mrf.mxu0
    %v430 = vpop.f32.mrf.mxu0
    %431 = vdwg.mxu0
    %v432 = vadd.f32 %v244, %v427
    %v433 = vxor.u32 %v432, 2147483648
    %v434 = vmul.f32 %v433, 1.442695
    %v435 = vpow.pop %v434
    %v436 = vadd.f32 %v435, 1.0
    %v437 = vrcp.pop %v436
    %v438 = vmul.f32 1.0, %v437
    %v439 = vtanh.pop %v432
    %v440 = vmul.f32 %v438, %v359
    %442 = vrot.lane.b32.xlu0 %v439, 32
    %v443 = vpop.permute.xlu0 %442
    %v445 = vmul.f32 %v438, %v443
    %447 = vrot.lane.b32.xlu0 %v445, 32
    %v448 = vpop.permute.xlu0 %447
    %v450 = vadd.f32 %v440, %v448
    %v451 = vtanh.pop %v450
    %453 = vrot.lane.b32.xlu0 %v451, 32
    %v454 = vpop.permute.xlu0 %453
    %v456 = vmul.f32 %v438, %v454
    %v457 = vpack.c.bf16 %v456, %v456
    %v460 = vunpack.c.l.s4 1966171168
    %v461 = vunpack.c.0.s8 %v460
    %v462 = vlaneseq
    %v463 = vshrl.u32 %v462, 7
    %v464 = vsub.s32 %v461, %v463
    %v465 = vrot.slane %v457, %v464
    %v467 = vunpack.c.l.s4 1966171168
    %v468 = vunpack.c.0.s8 %v467
    %v469 = vlaneseq
    %v470 = vshrl.u32 %v469, 7
    %v471 = vsub.s32 %v468, %v470
    %v472 = vrot.slane %v465, %v471
    %473 = vrot.lane.b32.xlu0 %v472, 64
    %v474 = vpop.permute.xlu0 %473
    %s476 = scalar_lea.vmem [#allocation10], 1
    %477 = vst.msk [vmem:[%s476] sm:$0x1] %vm385, %v474
    %478 = vrot.lane.b32.xlu0 %v457, 64
    %v479 = vpop.permute.xlu0 %478
    %v481 = vsel %vm286, %v479, 0
    %483 = vmatprep.subr.bf16.mxu0 0
    %484 = vmatpush1.bf16.msra.mxu0 0
    %485 = vmatprep.subr.bf16.mxu0 0
    %486 = vmatpush1.bf16.msra.mxu0 0
    %487 = vmatprep.subr.bf16.mxu0 0
    %488 = vmatpush1.bf16.msra.mxu0 0
    %489 = vmatprep.subr.bf16.mxu0 0
    %490 = vmatpush1.bf16.msra.mxu0 0
    %491 = vmatprep.subr.bf16.mxu0 0
    %492 = vmatpush1.bf16.msra.mxu0 0
    %493 = vmatprep.subr.bf16.mxu0 0
    %494 = vmatpush1.bf16.msra.mxu0 0
    %495 = vmatprep.subr.bf16.mxu0 0
    %496 = vmatpush1.bf16.msra.mxu0 %v283
    %497 = vmatprep.subr.bf16.mxu0 0
    %498 = vmatpush1.bf16.msra.mxu0 %v282
    %499 = vmatprep.subr.bf16.mxu0 0
    %500 = vmatpush2.bf16.msra.mxu0 0
    %501 = vmatprep.subr.bf16.mxu0 0
    %502 = vmatpush2.bf16.msra.mxu0 0
    %503 = vmatprep.subr.bf16.mxu0 0
    %504 = vmatpush2.bf16.msra.mxu0 0
    %505 = vmatprep.subr.bf16.mxu0 0
    %506 = vmatpush2.bf16.msra.mxu0 0
    %507 = vmatprep.subr.bf16.mxu0 0
    %508 = vmatpush2.bf16.msra.mxu0 0
    %509 = vmatprep.subr.bf16.mxu0 0
    %510 = vmatpush2.bf16.msra.mxu0 0
    %511 = vmatprep.subr.bf16.mxu0 0
    %512 = vmatpush2.bf16.msra.mxu0 0
    %513 = vmatprep.subr.bf16.mxu0 0
    %514 = vmatpush2.bf16.msra.mxu0 0
    %515 = vmatprep.mubr.bf16.mxu0 0
    %516 = vmatmul.mubr.bf16.gmra.mxu0 %v481
    %v517 = vpop.f32.mrf.mxu0
    %v518 = vadd.f32 0.0, %v517
    %v519 = vpop.f32.mrf.mxu0
    %v520 = vpop.f32.mrf.mxu0
    %v521 = vpop.f32.mrf.mxu0
    %522 = vdwg.mxu0
    %v523 = vadd.f32 %v243, %v518
    %v524 = vxor.u32 %v523, 2147483648
    %v525 = vmul.f32 %v524, 1.442695
    %v526 = vpow.pop %v525
    %v527 = vadd.f32 %v526, 1.0
    %v528 = vrcp.pop %v527
    %v529 = vmul.f32 1.0, %v528
    %v530 = vtanh.pop %v523
    %v531 = vmul.f32 %v529, %v450
    %533 = vrot.lane.b32.xlu0 %v530, 32
    %v534 = vpop.permute.xlu0 %533
    %v536 = vmul.f32 %v529, %v534
    %538 = vrot.lane.b32.xlu0 %v536, 32
    %v539 = vpop.permute.xlu0 %538
    %v541 = vadd.f32 %v531, %v539
    %v542 = vtanh.pop %v541
    %544 = vrot.lane.b32.xlu0 %v542, 32
    %v545 = vpop.permute.xlu0 %544
    %v547 = vmul.f32 %v529, %v545
    %v548 = vpack.c.bf16 %v547, %v547
    %v551 = vunpack.c.l.s4 1966171168
    %v552 = vunpack.c.0.s8 %v551
    %v553 = vlaneseq
    %v554 = vshrl.u32 %v553, 7
    %v555 = vsub.s32 %v552, %v554
    %v556 = vrot.slane %v548, %v555
    %v558 = vunpack.c.l.s4 1966171168
    %v559 = vunpack.c.0.s8 %v558
    %v560 = vlaneseq
    %v561 = vshrl.u32 %v560, 7
    %v562 = vsub.s32 %v559, %v561
    %v563 = vrot.slane %v556, %v562
    %564 = vrot.lane.b32.xlu0 %v563, 64
    %v565 = vpop.permute.xlu0 %564
    %s567 = scalar_lea.vmem [#allocation10], 2
    %568 = vst.msk [vmem:[%s567] sm:$0x1] %vm385, %v565
    %569 = vrot.lane.b32.xlu0 %v548, 64
    %v570 = vpop.permute.xlu0 %569
    %v572 = vsel %vm286, %v570, 0
    %574 = vmatprep.subr.bf16.mxu0 0
    %575 = vmatpush1.bf16.msra.mxu0 0
    %576 = vmatprep.subr.bf16.mxu0 0
    %577 = vmatpush1.bf16.msra.mxu0 0
    %578 = vmatprep.subr.bf16.mxu0 0
    %579 = vmatpush1.bf16.msra.mxu0 0
    %580 = vmatprep.subr.bf16.mxu0 0
    %581 = vmatpush1.bf16.msra.mxu0 0
    %582 = vmatprep.subr.bf16.mxu0 0
    %583 = vmatpush1.bf16.msra.mxu0 0
    %584 = vmatprep.subr.bf16.mxu0 0
    %585 = vmatpush1.bf16.msra.mxu0 0
    %586 = vmatprep.subr.bf16.mxu0 0
    %587 = vmatpush1.bf16.msra.mxu0 %v283
    %588 = vmatprep.subr.bf16.mxu0 0
    %589 = vmatpush1.bf16.msra.mxu0 %v282
    %590 = vmatprep.subr.bf16.mxu0 0
    %591 = vmatpush2.bf16.msra.mxu0 0
    %592 = vmatprep.subr.bf16.mxu0 0
    %593 = vmatpush2.bf16.msra.mxu0 0
    %594 = vmatprep.subr.bf16.mxu0 0
    %595 = vmatpush2.bf16.msra.mxu0 0
    %596 = vmatprep.subr.bf16.mxu0 0
    %597 = vmatpush2.bf16.msra.mxu0 0
    %598 = vmatprep.subr.bf16.mxu0 0
    %599 = vmatpush2.bf16.msra.mxu0 0
    %600 = vmatprep.subr.bf16.mxu0 0
    %601 = vmatpush2.bf16.msra.mxu0 0
    %602 = vmatprep.subr.bf16.mxu0 0
    %603 = vmatpush2.bf16.msra.mxu0 0
    %604 = vmatprep.subr.bf16.mxu0 0
    %605 = vmatpush2.bf16.msra.mxu0 0
    %606 = vmatprep.mubr.bf16.mxu0 0
    %607 = vmatmul.mubr.bf16.gmra.mxu0 %v572
    %v608 = vpop.f32.mrf.mxu0
    %v609 = vadd.f32 0.0, %v608
    %v610 = vpop.f32.mrf.mxu0
    %v611 = vpop.f32.mrf.mxu0
    %v612 = vpop.f32.mrf.mxu0
    %613 = vdwg.mxu0
    %v614 = vadd.f32 %v245, %v609
    %v615 = vxor.u32 %v614, 2147483648
    %v616 = vmul.f32 %v615, 1.442695
    %v617 = vpow.pop %v616
    %v618 = vadd.f32 %v617, 1.0
    %v619 = vrcp.pop %v618
    %v620 = vmul.f32 1.0, %v619
    %v621 = vtanh.pop %v614
    %v622 = vmul.f32 %v620, %v541
    %624 = vrot.lane.b32.xlu0 %v621, 32
    %v625 = vpop.permute.xlu0 %624
    %v627 = vmul.f32 %v620, %v625
    %629 = vrot.lane.b32.xlu0 %v627, 32
    %v630 = vpop.permute.xlu0 %629
    %v632 = vadd.f32 %v622, %v630
    %v633 = vtanh.pop %v632
    %635 = vrot.lane.b32.xlu0 %v633, 32
    %v636 = vpop.permute.xlu0 %635
    %v638 = vmul.f32 %v620, %v636
    %v639 = vpack.c.bf16 %v638, %v638
    %v642 = vunpack.c.l.s4 1966171168
    %v643 = vunpack.c.0.s8 %v642
    %v644 = vlaneseq
    %v645 = vshrl.u32 %v644, 7
    %v646 = vsub.s32 %v643, %v645
    %v647 = vrot.slane %v639, %v646
    %v649 = vunpack.c.l.s4 1966171168
    %v650 = vunpack.c.0.s8 %v649
    %v651 = vlaneseq
    %v652 = vshrl.u32 %v651, 7
    %v653 = vsub.s32 %v650, %v652
    %v654 = vrot.slane %v647, %v653
    %655 = vrot.lane.b32.xlu0 %v654, 64
    %v656 = vpop.permute.xlu0 %655
    %s658 = scalar_lea.vmem [#allocation10], 3
    %659 = vst.msk [vmem:[%s658] sm:$0x1] %vm385, %v656
    %660 = vrot.lane.b32.xlu0 %v639, 64
    %v661 = vpop.permute.xlu0 %660
    %v663 = vsel %vm286, %v661, 0
    %665 = vmatprep.subr.bf16.mxu0 0
    %666 = vmatpush1.bf16.msra.mxu0 0
    %667 = vmatprep.subr.bf16.mxu0 0
    %668 = vmatpush1.bf16.msra.mxu0 0
    %669 = vmatprep.subr.bf16.mxu0 0
    %670 = vmatpush1.bf16.msra.mxu0 0
    %671 = vmatprep.subr.bf16.mxu0 0
    %672 = vmatpush1.bf16.msra.mxu0 0
    %673 = vmatprep.subr.bf16.mxu0 0
    %674 = vmatpush1.bf16.msra.mxu0 0
    %675 = vmatprep.subr.bf16.mxu0 0
    %676 = vmatpush1.bf16.msra.mxu0 0
    %677 = vmatprep.subr.bf16.mxu0 0
    %678 = vmatpush1.bf16.msra.mxu0 %v283
    %679 = vmatprep.subr.bf16.mxu0 0
    %680 = vmatpush1.bf16.msra.mxu0 %v282
    %681 = vmatprep.subr.bf16.mxu0 0
    %682 = vmatpush2.bf16.msra.mxu0 0
    %683 = vmatprep.subr.bf16.mxu0 0
    %684 = vmatpush2.bf16.msra.mxu0 0
    %685 = vmatprep.subr.bf16.mxu0 0
    %686 = vmatpush2.bf16.msra.mxu0 0
    %687 = vmatprep.subr.bf16.mxu0 0
    %688 = vmatpush2.bf16.msra.mxu0 0
    %689 = vmatprep.subr.bf16.mxu0 0
    %690 = vmatpush2.bf16.msra.mxu0 0
    %691 = vmatprep.subr.bf16.mxu0 0
    %692 = vmatpush2.bf16.msra.mxu0 0
    %693 = vmatprep.subr.bf16.mxu0 0
    %694 = vmatpush2.bf16.msra.mxu0 0
    %695 = vmatprep.subr.bf16.mxu0 0
    %696 = vmatpush2.bf16.msra.mxu0 0
    %697 = vmatprep.mubr.bf16.mxu0 0
    %698 = vmatmul.mubr.bf16.gmra.mxu0 %v663
    %v699 = vpop.f32.mrf.mxu0
    %v700 = vadd.f32 0.0, %v699
    %v701 = vpop.f32.mrf.mxu0
    %v702 = vpop.f32.mrf.mxu0
    %v703 = vpop.f32.mrf.mxu0
    %704 = vdwg.mxu0
    %v705 = vadd.f32 %v253, %v700
    %v706 = vxor.u32 %v705, 2147483648
    %v707 = vmul.f32 %v706, 1.442695
    %v708 = vpow.pop %v707
    %v709 = vadd.f32 %v708, 1.0
    %v710 = vrcp.pop %v709
    %v711 = vmul.f32 1.0, %v710
    %v712 = vtanh.pop %v705
    %v713 = vmul.f32 %v711, %v632
    %715 = vrot.lane.b32.xlu0 %v712, 32
    %v716 = vpop.permute.xlu0 %715
    %v718 = vmul.f32 %v711, %v716
    %720 = vrot.lane.b32.xlu0 %v718, 32
    %v721 = vpop.permute.xlu0 %720
    %v723 = vadd.f32 %v713, %v721
    %v724 = vtanh.pop %v723
    %726 = vrot.lane.b32.xlu0 %v724, 32
    %v727 = vpop.permute.xlu0 %726
    %v729 = vmul.f32 %v711, %v727
    %v730 = vpack.c.bf16 %v729, %v729
    %v733 = vunpack.c.l.s4 1966171168
    %v734 = vunpack.c.0.s8 %v733
    %v735 = vlaneseq
    %v736 = vshrl.u32 %v735, 7
    %v737 = vsub.s32 %v734, %v736
    %v738 = vrot.slane %v730, %v737
    %v740 = vunpack.c.l.s4 1966171168
    %v741 = vunpack.c.0.s8 %v740
    %v742 = vlaneseq
    %v743 = vshrl.u32 %v742, 7
    %v744 = vsub.s32 %v741, %v743
    %v745 = vrot.slane %v738, %v744
    %746 = vrot.lane.b32.xlu0 %v745, 64
    %v747 = vpop.permute.xlu0 %746
    %s749 = scalar_lea.vmem [#allocation10], 4
    %750 = vst.msk [vmem:[%s749] sm:$0x1] %vm385, %v747
    %751 = vrot.lane.b32.xlu0 %v730, 64
    %v752 = vpop.permute.xlu0 %751
    %v754 = vsel %vm286, %v752, 0
    %756 = vmatprep.subr.bf16.mxu0 0
    %757 = vmatpush1.bf16.msra.mxu0 0
    %758 = vmatprep.subr.bf16.mxu0 0
    %759 = vmatpush1.bf16.msra.mxu0 0
    %760 = vmatprep.subr.bf16.mxu0 0
    %761 = vmatpush1.bf16.msra.mxu0 0
    %762 = vmatprep.subr.bf16.mxu0 0
    %763 = vmatpush1.bf16.msra.mxu0 0
    %764 = vmatprep.subr.bf16.mxu0 0
    %765 = vmatpush1.bf16.msra.mxu0 0
    %766 = vmatprep.subr.bf16.mxu0 0
    %767 = vmatpush1.bf16.msra.mxu0 0
    %768 = vmatprep.subr.bf16.mxu0 0
    %769 = vmatpush1.bf16.msra.mxu0 %v283
    %770 = vmatprep.subr.bf16.mxu0 0
    %771 = vmatpush1.bf16.msra.mxu0 %v282
    %772 = vmatprep.subr.bf16.mxu0 0
    %773 = vmatpush2.bf16.msra.mxu0 0
    %774 = vmatprep.subr.bf16.mxu0 0
    %775 = vmatpush2.bf16.msra.mxu0 0
    %776 = vmatprep.subr.bf16.mxu0 0
    %777 = vmatpush2.bf16.msra.mxu0 0
    %778 = vmatprep.subr.bf16.mxu0 0
    %779 = vmatpush2.bf16.msra.mxu0 0
    %780 = vmatprep.subr.bf16.mxu0 0
    %781 = vmatpush2.bf16.msra.mxu0 0
    %782 = vmatprep.subr.bf16.mxu0 0
    %783 = vmatpush2.bf16.msra.mxu0 0
    %784 = vmatprep.subr.bf16.mxu0 0
    %785 = vmatpush2.bf16.msra.mxu0 0
    %786 = vmatprep.subr.bf16.mxu0 0
    %787 = vmatpush2.bf16.msra.mxu0 0
    %788 = vmatprep.mubr.bf16.mxu0 0
    %789 = vmatmul.mubr.bf16.gmra.mxu0 %v754
    %v790 = vpop.f32.mrf.mxu0
    %v791 = vadd.f32 0.0, %v790
    %v792 = vpop.f32.mrf.mxu0
    %v793 = vpop.f32.mrf.mxu0
    %v794 = vpop.f32.mrf.mxu0
    %795 = vdwg.mxu0
    %v796 = vadd.f32 %v261, %v791
    %v797 = vxor.u32 %v796, 2147483648
    %v798 = vmul.f32 %v797, 1.442695
    %v799 = vpow.pop %v798
    %v800 = vadd.f32 %v799, 1.0
    %v801 = vrcp.pop %v800
    %v802 = vmul.f32 1.0, %v801
    %v803 = vtanh.pop %v796
    %v804 = vmul.f32 %v802, %v723
    %806 = vrot.lane.b32.xlu0 %v803, 32
    %v807 = vpop.permute.xlu0 %806
    %v809 = vmul.f32 %v802, %v807
    %811 = vrot.lane.b32.xlu0 %v809, 32
    %v812 = vpop.permute.xlu0 %811
    %v814 = vadd.f32 %v804, %v812
    %v815 = vtanh.pop %v814
    %817 = vrot.lane.b32.xlu0 %v815, 32
    %v818 = vpop.permute.xlu0 %817
    %v820 = vmul.f32 %v802, %v818
    %v821 = vpack.c.bf16 %v820, %v820
    %v824 = vunpack.c.l.s4 1966171168
    %v825 = vunpack.c.0.s8 %v824
    %v826 = vlaneseq
    %v827 = vshrl.u32 %v826, 7
    %v828 = vsub.s32 %v825, %v827
    %v829 = vrot.slane %v821, %v828
    %v831 = vunpack.c.l.s4 1966171168
    %v832 = vunpack.c.0.s8 %v831
    %v833 = vlaneseq
    %v834 = vshrl.u32 %v833, 7
    %v835 = vsub.s32 %v832, %v834
    %v836 = vrot.slane %v829, %v835
    %837 = vrot.lane.b32.xlu0 %v836, 64
    %v838 = vpop.permute.xlu0 %837
    %s840 = scalar_lea.vmem [#allocation10], 5
    %841 = vst.msk [vmem:[%s840] sm:$0x1] %vm385, %v838
    %842 = vrot.lane.b32.xlu0 %v821, 64
    %v843 = vpop.permute.xlu0 %842
    %v845 = vsel %vm286, %v843, 0
    %847 = vmatprep.subr.bf16.mxu0 0
    %848 = vmatpush1.bf16.msra.mxu0 0
    %849 = vmatprep.subr.bf16.mxu0 0
    %850 = vmatpush1.bf16.msra.mxu0 0
    %851 = vmatprep.subr.bf16.mxu0 0
    %852 = vmatpush1.bf16.msra.mxu0 0
    %853 = vmatprep.subr.bf16.mxu0 0
    %854 = vmatpush1.bf16.msra.mxu0 0
    %855 = vmatprep.subr.bf16.mxu0 0
    %856 = vmatpush1.bf16.msra.mxu0 0
    %857 = vmatprep.subr.bf16.mxu0 0
    %858 = vmatpush1.bf16.msra.mxu0 0
    %859 = vmatprep.subr.bf16.mxu0 0
    %860 = vmatpush1.bf16.msra.mxu0 %v283
    %861 = vmatprep.subr.bf16.mxu0 0
    %862 = vmatpush1.bf16.msra.mxu0 %v282
    %863 = vmatprep.subr.bf16.mxu0 0
    %864 = vmatpush2.bf16.msra.mxu0 0
    %865 = vmatprep.subr.bf16.mxu0 0
    %866 = vmatpush2.bf16.msra.mxu0 0
    %867 = vmatprep.subr.bf16.mxu0 0
    %868 = vmatpush2.bf16.msra.mxu0 0
    %869 = vmatprep.subr.bf16.mxu0 0
    %870 = vmatpush2.bf16.msra.mxu0 0
    %871 = vmatprep.subr.bf16.mxu0 0
    %872 = vmatpush2.bf16.msra.mxu0 0
    %873 = vmatprep.subr.bf16.mxu0 0
    %874 = vmatpush2.bf16.msra.mxu0 0
    %875 = vmatprep.subr.bf16.mxu0 0
    %876 = vmatpush2.bf16.msra.mxu0 0
    %877 = vmatprep.subr.bf16.mxu0 0
    %878 = vmatpush2.bf16.msra.mxu0 0
    %879 = vmatprep.mubr.bf16.mxu0 0
    %880 = vmatmul.mubr.bf16.gmra.mxu0 %v845
    %v881 = vpop.f32.mrf.mxu0
    %v882 = vadd.f32 0.0, %v881
    %v883 = vpop.f32.mrf.mxu0
    %v884 = vpop.f32.mrf.mxu0
    %v885 = vpop.f32.mrf.mxu0
    %886 = vdwg.mxu0
    %v887 = vadd.f32 %v260, %v882
    %v888 = vxor.u32 %v887, 2147483648
    %v889 = vmul.f32 %v888, 1.442695
    %v890 = vpow.pop %v889
    %v891 = vadd.f32 %v890, 1.0
    %v892 = vrcp.pop %v891
    %v893 = vmul.f32 1.0, %v892
    %v894 = vtanh.pop %v887
    %v895 = vmul.f32 %v893, %v814
    %897 = vrot.lane.b32.xlu0 %v894, 32
    %v898 = vpop.permute.xlu0 %897
    %v900 = vmul.f32 %v893, %v898
    %902 = vrot.lane.b32.xlu0 %v900, 32
    %v903 = vpop.permute.xlu0 %902
    %v905 = vadd.f32 %v895, %v903
    %v906 = vtanh.pop %v905
    %908 = vrot.lane.b32.xlu0 %v906, 32
    %v909 = vpop.permute.xlu0 %908
    %v911 = vmul.f32 %v893, %v909
    %v912 = vpack.c.bf16 %v911, %v911
    %v915 = vunpack.c.l.s4 1966171168
    %v916 = vunpack.c.0.s8 %v915
    %v917 = vlaneseq
    %v918 = vshrl.u32 %v917, 7
    %v919 = vsub.s32 %v916, %v918
    %v920 = vrot.slane %v912, %v919
    %v922 = vunpack.c.l.s4 1966171168
    %v923 = vunpack.c.0.s8 %v922
    %v924 = vlaneseq
    %v925 = vshrl.u32 %v924, 7
    %v926 = vsub.s32 %v923, %v925
    %v927 = vrot.slane %v920, %v926
    %928 = vrot.lane.b32.xlu0 %v927, 64
    %v929 = vpop.permute.xlu0 %928
    %s931 = scalar_lea.vmem [#allocation10], 6
    %932 = vst.msk [vmem:[%s931] sm:$0x1] %vm385, %v929
    %933 = vrot.lane.b32.xlu0 %v912, 64
    %v934 = vpop.permute.xlu0 %933
    %v936 = vsel %vm286, %v934, 0
    %938 = vmatprep.subr.bf16.mxu0 0
    %939 = vmatpush1.bf16.msra.mxu0 0
    %940 = vmatprep.subr.bf16.mxu0 0
    %941 = vmatpush1.bf16.msra.mxu0 0
    %942 = vmatprep.subr.bf16.mxu0 0
    %943 = vmatpush1.bf16.msra.mxu0 0
    %944 = vmatprep.subr.bf16.mxu0 0
    %945 = vmatpush1.bf16.msra.mxu0 0
    %946 = vmatprep.subr.bf16.mxu0 0
    %947 = vmatpush1.bf16.msra.mxu0 0
    %948 = vmatprep.subr.bf16.mxu0 0
    %949 = vmatpush1.bf16.msra.mxu0 0
    %950 = vmatprep.subr.bf16.mxu0 0
    %951 = vmatpush1.bf16.msra.mxu0 %v283
    %952 = vmatprep.subr.bf16.mxu0 0
    %953 = vmatpush1.bf16.msra.mxu0 %v282
    %954 = vmatprep.subr.bf16.mxu0 0
    %955 = vmatpush2.bf16.msra.mxu0 0
    %956 = vmatprep.subr.bf16.mxu0 0
    %957 = vmatpush2.bf16.msra.mxu0 0
    %958 = vmatprep.subr.bf16.mxu0 0
    %959 = vmatpush2.bf16.msra.mxu0 0
    %960 = vmatprep.subr.bf16.mxu0 0
    %961 = vmatpush2.bf16.msra.mxu0 0
    %962 = vmatprep.subr.bf16.mxu0 0
    %963 = vmatpush2.bf16.msra.mxu0 0
    %964 = vmatprep.subr.bf16.mxu0 0
    %965 = vmatpush2.bf16.msra.mxu0 0
    %966 = vmatprep.subr.bf16.mxu0 0
    %967 = vmatpush2.bf16.msra.mxu0 0
    %968 = vmatprep.subr.bf16.mxu0 0
    %969 = vmatpush2.bf16.msra.mxu0 0
    %970 = vmatprep.mubr.bf16.mxu0 0
    %971 = vmatmul.mubr.bf16.gmra.mxu0 %v936
    %v972 = vpop.f32.mrf.mxu0
    %v973 = vadd.f32 0.0, %v972
    %v974 = vpop.f32.mrf.mxu0
    %v975 = vpop.f32.mrf.mxu0
    %v976 = vpop.f32.mrf.mxu0
    %977 = vdwg.mxu0
    %v978 = vadd.f32 %v262, %v973
    %v979 = vxor.u32 %v978, 2147483648
    %v980 = vmul.f32 %v979, 1.442695
    %v981 = vpow.pop %v980
    %v982 = vadd.f32 %v981, 1.0
    %v983 = vrcp.pop %v982
    %v984 = vmul.f32 1.0, %v983
    %v985 = vtanh.pop %v978
    %v986 = vmul.f32 %v984, %v905
    %988 = vrot.lane.b32.xlu0 %v985, 32
    %v989 = vpop.permute.xlu0 %988
    %v991 = vmul.f32 %v984, %v989
    %993 = vrot.lane.b32.xlu0 %v991, 32
    %v994 = vpop.permute.xlu0 %993
    %v996 = vadd.f32 %v986, %v994
    %v997 = vtanh.pop %v996
    %999 = vrot.lane.b32.xlu0 %v997, 32
    %v1000 = vpop.permute.xlu0 %999
    %v1002 = vmul.f32 %v984, %v1000
    %v1003 = vpack.c.bf16 %v1002, %v1002
    %v1006 = vunpack.c.l.s4 1966171168
    %v1007 = vunpack.c.0.s8 %v1006
    %v1008 = vlaneseq
    %v1009 = vshrl.u32 %v1008, 7
    %v1010 = vsub.s32 %v1007, %v1009
    %v1011 = vrot.slane %v1003, %v1010
    %v1013 = vunpack.c.l.s4 1966171168
    %v1014 = vunpack.c.0.s8 %v1013
    %v1015 = vlaneseq
    %v1016 = vshrl.u32 %v1015, 7
    %v1017 = vsub.s32 %v1014, %v1016
    %v1018 = vrot.slane %v1011, %v1017
    %1019 = vrot.lane.b32.xlu0 %v1018, 64
    %v1020 = vpop.permute.xlu0 %1019
    %s1022 = scalar_lea.vmem [#allocation10], 7
    %1023 = vst.msk [vmem:[%s1022] sm:$0x1] %vm385, %v1020
    %v1026 = vunpack.c.l.s4 1983009808
    %v1027 = vunpack.c.0.s8 %v1026
    %v1028 = vlaneseq
    %v1029 = vshrl.u32 %v1028, 7
    %v1030 = vsub.s32 %v1027, %v1029
    %v1031 = vrot.slane %v1002, %v1030
    %1032 = vrot.lane.b32.xlu0 %v1031, 64
    %v1033 = vpop.permute.xlu0 %1032
    %vm1035 = vcmask 254976
    %1036 = vst.msk [vmem:[#allocation11] sm:$0x3] %vm1035, %v1033
    %v1039 = vunpack.c.l.s4 1983009808
    %v1040 = vunpack.c.0.s8 %v1039
    %v1041 = vlaneseq
    %v1042 = vshrl.u32 %v1041, 7
    %v1043 = vsub.s32 %v1040, %v1042
    %v1044 = vrot.slane %v996, %v1043
    %1045 = vrot.lane.b32.xlu0 %v1044, 96
    %v1046 = vpop.permute.xlu0 %1045
    %1048 = vst.msk [vmem:[#allocation13] sm:$0x3] %vm1035, %v1046
    // Predicated region
    $region46: #{tpu_custom_call.1} parent=1 // pred_check
      _
    $region47: #{tpu_custom_call.1} parent=1 // pred_check_branch
      %1050 = sbr.rel (0) target = $region49
    $region48: #{tpu_custom_call.1} parent=1 // pred_region
      %s1052 = ssub.s32 128, 128
      %1053 = vsyncadd [#allocation4], %s1052
      %s1054 = sshll.u32 [#allocation10], 4
      %s1055 = int_to_ptr.vmem [resolvable:$true] %s1054
      %1060 = dma.vmem_to_hbm [thread:$0]  %s1055, 128, %s6, [#allocation4], 16, 16, 1
    $region49: #{tpu_custom_call.1} parent=1 // pred_fallthru
      _
    // Predicated region
    $region50: #{tpu_custom_call.1} parent=1 // pred_check
      _
    $region51: #{tpu_custom_call.1} parent=1 // pred_check_branch
      %1062 = sbr.rel (0) target = $region53
    $region52: #{tpu_custom_call.1} parent=1 // pred_region
      %s1064 = ssub.s32 32, 32
      %1065 = vsyncadd [#allocation12], %s1064
      %s1067 = sshll.u32 [#allocation11], 4
      %s1068 = int_to_ptr.vmem [resolvable:$true] %s1067
      %1070 = dma.vmem_to_hbm [thread:$0]  %s1068, 32, %s7, [#allocation12]
    $region53: #{tpu_custom_call.1} parent=1 // pred_fallthru
      _
    // Predicated region
    $region54: #{tpu_custom_call.1} parent=1 // pred_check
      _
    $region55: #{tpu_custom_call.1} parent=1 // pred_check_branch
      %1072 = sbr.rel (0) target = $region57
    $region56: #{tpu_custom_call.1} parent=1 // pred_region
      %s1074 = ssub.s32 32, 32
      %1075 = vsyncadd [#allocation12], %s1074
      %s1077 = sshll.u32 [#allocation13], 4
      %s1078 = int_to_ptr.vmem [resolvable:$true] %s1077
      %1080 = dma.vmem_to_hbm [thread:$0]  %s1078, 32, %s8, [#allocation12]
    $region57: #{tpu_custom_call.1} parent=1 // pred_fallthru
      _
    // Predicated region
    $region58: #{tpu_custom_call.1} parent=1 // pred_check
      _
    $region59: #{tpu_custom_call.1} parent=1 // pred_check_branch
      %1082 = sbr.rel (0) target = $region61
    $region60: #{tpu_custom_call.1} parent=1 // pred_region
      %1083 = dma.done [#allocation4], 128
    $region61: #{tpu_custom_call.1} parent=1 // pred_fallthru
      _
    // Predicated region
    $region62: #{tpu_custom_call.1} parent=1 // pred_check
      _
    $region63: #{tpu_custom_call.1} parent=1 // pred_check_branch
      %1085 = sbr.rel (0) target = $region65
    $region64: #{tpu_custom_call.1} parent=1 // pred_region
      %1086 = dma.done [#allocation12], 32
    $region65: #{tpu_custom_call.1} parent=1 // pred_fallthru
      _
    // Predicated region
    $region66: #{tpu_custom_call.1} parent=1 // pred_check
      _
    $region67: #{tpu_custom_call.1} parent=1 // pred_check_branch
      %1088 = sbr.rel (0) target = $region69
    $region68: #{tpu_custom_call.1} parent=1 // pred_region
      %1089 = dma.done [#allocation12], 32
    $region69: #{tpu_custom_call.1} parent=1 // pred_fallthru
      _
    %1090 = vsyncpa [#allocation3], 1
    %1091 = vsyncpa [#allocation6], 1
    %1092 = vsyncpa [#allocation9], 1
    %1093 = vsyncpa [#allocation4], 1
    %1094 = vsyncpa [#allocation12], 1

</llo_original>
